<compile_context>
chip_gen: v5e
topology: v5e:2x2
jax: 0.10.0
libtpu: 0.0.40
codegen_flags: <defaults>
</compile_context>

<pallas_src>
import jax
import jax.numpy as jnp
import numpy as np
from jax import lax
from jax.experimental import pallas as pl
from jax.experimental.pallas import tpu as pltpu


def _vmem_limit_bytes():
    """~3/4 of physical VMEM: 48 MiB on v7x (64 MiB), 96 MiB on v5e/v6e (128 MiB)."""
    try:
        cap = int(pltpu.get_tpu_info().vmem_capacity_bytes)
    except Exception:
        cap = 128 * 1024 * 1024
    if cap <= 0:
        cap = 128 * 1024 * 1024
    return min(96 * 1024 * 1024, (cap * 3) // 4)


def _make_mha_kernel(scale, num_heads, head_dim, dim_self, compute_dtype):
    hd, c, cdt = head_dim, dim_self, compute_dtype

    def kernel(x_ref, y_ref, wq_ref, bq_ref, wkv_ref, bkv_ref, wo_ref, bo_ref,
               out_ref, attn_ref, kv_ref):
        # --- K|V projection: depends only on the batch index, so compute it
        # once per batch (first q-tile) into a persistent VMEM cache.  The
        # q-tile grid axis is "arbitrary", so i==0 runs before i>0 per core.
        @pl.when(pl.program_id(1) == 0)
        def _():
            y = y_ref[0].astype(cdt)                                    # (M, D)
            kv = jnp.dot(y, wkv_ref[...],                               # (M, 2C)
                         preferred_element_type=jnp.float32) + bkv_ref[...]
            kv_ref[...] = kv.astype(cdt)

        # --- Full-width Q projection (fills MXU output lanes); fold the
        # softmax scale into Q (and its bias) once.
        x = x_ref[0].astype(cdt)                                        # (tn, C)
        q = jnp.dot(x, wq_ref[...], preferred_element_type=jnp.float32)
        q = ((q + bq_ref[...]) * scale).astype(cdt)                     # (tn, C)

        kv = kv_ref[...]                                                # (M, 2C)

        acc = None  # output-projection accumulator, lives in vregs (static unroll)
        for h in range(num_heads):
            qh = q[:, h * hd:(h + 1) * hd]                              # (tn, hd)
            kh = kv[:, h * hd:(h + 1) * hd]                             # (M, hd)
            vh = kv[:, c + h * hd:c + (h + 1) * hd]                     # (M, hd)

            # scores[n, m] = sum_d qh[n, d] * kh[m, d]; softmax over keys (f32).
            s = lax.dot_general(qh, kh, (((1,), (1,)), ((), ())),
                                preferred_element_type=jnp.float32)     # (tn, M)
            s = s - jnp.max(s, axis=-1, keepdims=True)
            e = jnp.exp(s)
            inv = pl.reciprocal(jnp.sum(e, axis=-1, keepdims=True), approx=True)
            a = e * inv                                                  # (tn, M)
            attn_ref[0, h] = a.astype(attn_ref.dtype)

            # out_h[n, d] = sum_m a[n, m] * vh[m, d], then project + accumulate.
            o = jnp.dot(a.astype(cdt), vh,
                        preferred_element_type=jnp.float32)              # (tn, hd)
            contrib = jnp.dot(o.astype(cdt), wo_ref[h * hd:(h + 1) * hd, :],
                              preferred_element_type=jnp.float32)        # (tn, C)
            acc = contrib if acc is None else acc + contrib

        out_ref[0] = (acc + bo_ref[...]).astype(out_ref.dtype)

    return kernel


def multi_head_attention(x, y, params, num_heads, *, attn_dtype=jnp.float32):
    b, n, c = x.shape
    _, m, d = y.shape
    assert c % num_heads == 0
    hd = c // num_heads
    scale = float(hd) ** (-0.5)

    # bf16 MXU operands when inputs are f32 (native MXU dtype on v5e/v6e/v7x);
    # accumulation and softmax stay in f32 inside the kernel.
    cdt = jnp.bfloat16 if x.dtype == jnp.float32 else x.dtype

    # Query tiling: pad N to a tile multiple instead of falling back to one
    # whole-N block (keeps pipelining / megacore sharding and bounds VMEM).
    if n % 256 == 0 and n >= 256:
        tn = 256
    elif n >= 128:
        tn = 128
    else:
        tn = max(8, ((n + 7) // 8) * 8)
    n_pad = pl.cdiv(n, tn) * tn
    if n_pad != n:
        x = jnp.pad(x, ((0, 0), (0, n_pad - n), (0, 0)))
    nt = n_pad // tn

    # Weights cast to the MXU dtype once in the wrapper (halves weight HBM
    # traffic, no per-step casts in the kernel).  Biases stay f32.
    wq = params["wq"].astype(cdt)     # (C, C)
    wkv = params["wkv"].astype(cdt)   # (D, 2C): cols [0,C)=keys, [C,2C)=values
    wo = params["wo"].astype(cdt)     # (C, C)
    bq, bkv, bo = params["bq"], params["bkv"], params["bo"]

    kernel = _make_mha_kernel(scale=scale, num_heads=num_heads, head_dim=hd,
                              dim_self=c, compute_dtype=cdt)

    out, attn_bhnm = pl.pallas_call(
        kernel,
        grid=(b, nt),
        in_specs=[
            pl.BlockSpec((1, tn, c), lambda bb, i: (bb, i, 0)),      # x tile
            pl.BlockSpec((1, m, d), lambda bb, i: (bb, 0, 0)),       # y (per batch)
            # Constant index maps: weights are DMA'd once and stay VMEM-resident.
            pl.BlockSpec((c, c), lambda bb, i: (0, 0)),              # W_q
            pl.BlockSpec((1, c), lambda bb, i: (0, 0)),              # b_q
            pl.BlockSpec((d, 2 * c), lambda bb, i: (0, 0)),          # W_kv
            pl.BlockSpec((1, 2 * c), lambda bb, i: (0, 0)),          # b_kv
            pl.BlockSpec((c, c), lambda bb, i: (0, 0)),              # W_proj
            pl.BlockSpec((1, c), lambda bb, i: (0, 0)),              # b_proj
        ],
        out_specs=[
            pl.BlockSpec((1, tn, c), lambda bb, i: (bb, i, 0)),              # out
            pl.BlockSpec((1, num_heads, tn, m), lambda bb, i: (bb, 0, i, 0)),  # attn
        ],
        out_shape=[
            jax.ShapeDtypeStruct((b, n_pad, c), x.dtype),
            # Lane-dense (B, H, N, M) layout; set attn_dtype=jnp.bfloat16 to
            # halve the attention-probability HBM writeback.
            jax.ShapeDtypeStruct((b, num_heads, n_pad, m), attn_dtype),
        ],
        scratch_shapes=[pltpu.VMEM((m, 2 * c), cdt)],   # per-batch K|V cache
        compiler_params=pltpu.CompilerParams(
            # batch is "parallel" (megacore on v7x; keep B*1 >= 2 there);
            # q-tile axis must stay "arbitrary" for the K|V-cache ordering.
            dimension_semantics=("parallel", "arbitrary"),
            vmem_limit_bytes=_vmem_limit_bytes(),
        ),
    )(x, y, wq, bq, wkv, bkv, wo, bo)

    out = out[:, :n]
    attn_bhnm = attn_bhnm[:, :, :n]
    # PyTorch parity: (B, N, M, H).  Drop this transpose (an extra HBM round
    # trip, H on the lane dim) if the consumer accepts (B, H, N, M).
    attention = jnp.transpose(attn_bhnm, (0, 2, 3, 1))
    return out, attention


def reference_forward(x, y, params, num_heads):
    """Pure-JAX (f32) mirror of the PyTorch forward for correctness checking."""
    b, n, c = x.shape
    _, m, d = y.shape
    hd = c // num_heads
    scale = float(hd) ** (-0.5)
    q = (x @ params["wq"] + params["bq"][0]).reshape(b, n, num_heads, hd)
    kv = (y @ params["wkv"] + params["bkv"][0]).reshape(b, m, 2, num_heads, hd)
    k, v = kv[:, :, 0], kv[:, :, 1]
    att = jnp.einsum('bnhd,bmhd->bnmh', q, k) * scale
    att = jax.nn.softmax(att, axis=2)
    out = jnp.einsum('bnmh,bmhd->bnhd', att, v).reshape(b, n, c)
    out = out @ params["wo"] + params["bo"][0]
    return out, att


def init_params(key, dim_self, dim_ref):
    ks = jax.random.split(key, 6)
    s = 0.05
    return {
        "wq":  s * jax.random.normal(ks[0], (dim_self, dim_self), jnp.float32),
        "bq":  s * jax.random.normal(ks[1], (1, dim_self), jnp.float32),
        "wkv": s * jax.random.normal(ks[2], (dim_ref, 2 * dim_self), jnp.float32),
        "bkv": s * jax.random.normal(ks[3], (1, 2 * dim_self), jnp.float32),
        "wo":  s * jax.random.normal(ks[4], (dim_self, dim_self), jnp.float32),
        "bo":  s * jax.random.normal(ks[5], (1, dim_self), jnp.float32),
    }


if __name__ == "__main__":
    # Small but lane-dense shapes (multiples of 128).
    B, N, M = 2, 128, 128
    DIM_SELF, DIM_REF, NUM_HEADS = 128, 128, 4

    key = jax.random.PRNGKey(0)
    kx, ky, kp = jax.random.split(key, 3)
    x = jax.random.normal(kx, (B, N, DIM_SELF), jnp.float32)
    y = jax.random.normal(ky, (B, M, DIM_REF), jnp.float32)
    params = init_params(kp, DIM_SELF, DIM_REF)

    out, attention = multi_head_attention(x, y, params, NUM_HEADS)
    out = jax.block_until_ready(out)
    attention = jax.block_until_ready(attention)

    out_ref, attn_ref = reference_forward(x, y, params, NUM_HEADS)
    assert out.shape == (B, N, DIM_SELF)
    assert attention.shape == (B, N, M, NUM_HEADS)
    # Tolerance relaxed vs. the pure-f32 reference because the kernel feeds
    # the MXU with bf16 operands (f32 accumulation, f32 softmax).
    np.testing.assert_allclose(np.asarray(out), np.asarray(out_ref),
                               rtol=1e-2, atol=1e-2)
    np.testing.assert_allclose(np.asarray(attention), np.asarray(attn_ref),
                               rtol=1e-2, atol=1e-2)
    print("KERNEL_OK")
</pallas_src>

<mosaic_0001>
module attributes {stable_mosaic.version = 11 : i64} {
  func.func @kernel(%arg0: i32, %arg1: i32, %arg2: memref<1x128x128xf32, #tpu.memory_space<vmem>>, %arg3: memref<1x128x128xf32, #tpu.memory_space<vmem>>, %arg4: memref<128x128xbf16, #tpu.memory_space<vmem>>, %arg5: memref<1x128xf32, #tpu.memory_space<vmem>>, %arg6: memref<128x256xbf16, #tpu.memory_space<vmem>>, %arg7: memref<1x256xf32, #tpu.memory_space<vmem>>, %arg8: memref<128x128xbf16, #tpu.memory_space<vmem>>, %arg9: memref<1x128xf32, #tpu.memory_space<vmem>>, %arg10: memref<1x128x128xf32, #tpu.memory_space<vmem>>, %arg11: memref<1x4x128x128xf32, #tpu.memory_space<vmem>>, %arg12: memref<128x256xbf16, #tpu.memory_space<vmem>>) attributes {dimension_semantics = [#tpu.dimension_semantics<parallel>, #tpu.dimension_semantics<arbitrary>], iteration_bounds = array<i64: 2, 1>, scalar_prefetch = 0 : i64, scratch_operands = 1 : i64, tpu.core_type = #tpu.core_type<tc>, window_params = [{transform_indices = @transform_0, window_bounds = array<i64: 1, 128, 128>}, {transform_indices = @transform_1, window_bounds = array<i64: 1, 128, 128>}, {pipeline_mode = #tpu.pipeline_mode<synchronous>, transform_indices = @transform_2, window_bounds = array<i64: 128, 128>}, {pipeline_mode = #tpu.pipeline_mode<synchronous>, transform_indices = @transform_3, window_bounds = array<i64: 1, 128>}, {pipeline_mode = #tpu.pipeline_mode<synchronous>, transform_indices = @transform_4, window_bounds = array<i64: 128, 256>}, {pipeline_mode = #tpu.pipeline_mode<synchronous>, transform_indices = @transform_5, window_bounds = array<i64: 1, 256>}, {pipeline_mode = #tpu.pipeline_mode<synchronous>, transform_indices = @transform_6, window_bounds = array<i64: 128, 128>}, {pipeline_mode = #tpu.pipeline_mode<synchronous>, transform_indices = @transform_7, window_bounds = array<i64: 1, 128>}, {transform_indices = @transform_8, window_bounds = array<i64: 1, 128, 128>}, {transform_indices = @transform_9, window_bounds = array<i64: 1, 4, 128, 128>}]} {
    %c0_i32 = arith.constant 0 : i32
    %0 = arith.cmpi eq, %arg1, %c0_i32 : i32
    %1 = arith.extui %0 : i1 to i32
    %c0_i32_0 = arith.constant 0 : i32
    %2 = arith.cmpi ne, %1, %c0_i32_0 : i32
    scf.if %2 {
      %c0_53 = arith.constant 0 : index
      %c0_54 = arith.constant 0 : index
      %c0_55 = arith.constant 0 : index
      %112 = vector.load %arg3[%c0_53, %c0_54, %c0_55] : memref<1x128x128xf32, #tpu.memory_space<vmem>>, vector<1x128x128xf32>
      %113 = vector.shape_cast %112 : vector<1x128x128xf32> to vector<128x128xf32>
      %114 = arith.truncf %113 : vector<128x128xf32> to vector<128x128xbf16>
      %c0_56 = arith.constant 0 : index
      %c0_57 = arith.constant 0 : index
      %115 = vector.load %arg6[%c0_56, %c0_57] : memref<128x256xbf16, #tpu.memory_space<vmem>>, vector<128x256xbf16>
      %cst_58 = arith.constant dense<0.000000e+00> : vector<128x256xf32>
      %116 = tpu.matmul %114, %115, %cst_58 {dimension_numbers = #tpu.dot_dimension_numbers<[1], [0], [0], [1], [0, 0, 1, 1], [], []>} : vector<128x128xbf16>, vector<128x256xbf16>, vector<128x256xf32> -> vector<128x256xf32>
      %c0_59 = arith.constant 0 : index
      %c0_60 = arith.constant 0 : index
      %117 = vector.load %arg7[%c0_59, %c0_60] : memref<1x256xf32, #tpu.memory_space<vmem>>, vector<1x256xf32>
      %118 = vector.broadcast %117 : vector<1x256xf32> to vector<128x256xf32>
      %119 = arith.addf %116, %118 : vector<128x256xf32>
      %120 = arith.truncf %119 : vector<128x256xf32> to vector<128x256xbf16>
      %c0_61 = arith.constant 0 : index
      %c0_62 = arith.constant 0 : index
      %121 = vector.load %arg12[%c0_61, %c0_62] : memref<128x256xbf16, #tpu.memory_space<vmem>>, vector<128x256xbf16>
      tpu.vector_store %arg12[%c0_61, %c0_62], %120 {strides = array<i32>} : memref<128x256xbf16, #tpu.memory_space<vmem>>, vector<128x256xbf16>,
    } else {
    }
    %c0 = arith.constant 0 : index
    %c0_1 = arith.constant 0 : index
    %c0_2 = arith.constant 0 : index
    %3 = vector.load %arg2[%c0, %c0_1, %c0_2] : memref<1x128x128xf32, #tpu.memory_space<vmem>>, vector<1x128x128xf32>
    %4 = vector.shape_cast %3 : vector<1x128x128xf32> to vector<128x128xf32>
    %5 = arith.truncf %4 : vector<128x128xf32> to vector<128x128xbf16>
    %c0_3 = arith.constant 0 : index
    %c0_4 = arith.constant 0 : index
    %6 = vector.load %arg4[%c0_3, %c0_4] : memref<128x128xbf16, #tpu.memory_space<vmem>>, vector<128x128xbf16>
    %cst = arith.constant dense<0.000000e+00> : vector<128x128xf32>
    %7 = tpu.matmul %5, %6, %cst {dimension_numbers = #tpu.dot_dimension_numbers<[1], [0], [0], [1], [0, 0, 1, 1], [], []>} : vector<128x128xbf16>, vector<128x128xbf16>, vector<128x128xf32> -> vector<128x128xf32>
    %c0_5 = arith.constant 0 : index
    %c0_6 = arith.constant 0 : index
    %8 = vector.load %arg5[%c0_5, %c0_6] : memref<1x128xf32, #tpu.memory_space<vmem>>, vector<1x128xf32>
    %9 = vector.broadcast %8 : vector<1x128xf32> to vector<128x128xf32>
    %10 = arith.addf %7, %9 : vector<128x128xf32>
    %cst_7 = arith.constant 0.176776692 : f32
    %11 = vector.broadcast %cst_7 : f32 to vector<128x128xf32>
    %12 = arith.mulf %10, %11 : vector<128x128xf32>
    %13 = arith.truncf %12 : vector<128x128xf32> to vector<128x128xbf16>
    %c0_8 = arith.constant 0 : index
    %c0_9 = arith.constant 0 : index
    %14 = vector.load %arg12[%c0_8, %c0_9] : memref<128x256xbf16, #tpu.memory_space<vmem>>, vector<128x256xbf16>
    %15 = vector.extract_strided_slice %13 {offsets = [0, 0], sizes = [128, 32], strides = [1, 1]} : vector<128x128xbf16> to vector<128x32xbf16>
    %16 = vector.extract_strided_slice %14 {offsets = [0, 0], sizes = [128, 32], strides = [1, 1]} : vector<128x256xbf16> to vector<128x32xbf16>
    %17 = vector.extract_strided_slice %14 {offsets = [0, 128], sizes = [128, 32], strides = [1, 1]} : vector<128x256xbf16> to vector<128x32xbf16>
    %cst_10 = arith.constant dense<0.000000e+00> : vector<128x128xf32>
    %18 = tpu.matmul %15, %16, %cst_10 {dimension_numbers = #tpu.dot_dimension_numbers<[1], [1], [0], [0], [0, 0, 1, 0], [], []>} : vector<128x32xbf16>, vector<128x32xbf16>, vector<128x128xf32> -> vector<128x128xf32>
    %cst_11 = arith.constant dense<0xFF800000> : vector<128xf32>
    %19 = vector.multi_reduction <maximumf>, %18, %cst_11 [1] : vector<128x128xf32> to vector<128xf32>
    %20 = vector.shape_cast %19 : vector<128xf32> to vector<128x1xf32>
    %21 = vector.broadcast %20 : vector<128x1xf32> to vector<128x128xf32>
    %22 = arith.subf %18, %21 : vector<128x128xf32>
    %23 = math.exp %22 : vector<128x128xf32>
    %cst_12 = arith.constant dense<0.000000e+00> : vector<128xf32>
    %24 = vector.multi_reduction <add>, %23, %cst_12 [1] : vector<128x128xf32> to vector<128xf32>
    %25 = vector.shape_cast %24 : vector<128xf32> to vector<128x1xf32>
    %26 = tpu.reciprocal %25 {approx = true} : vector<128x1xf32> -> vector<128x1xf32>
    %27 = vector.broadcast %26 : vector<128x1xf32> to vector<128x128xf32>
    %28 = arith.mulf %23, %27 : vector<128x128xf32>
    %c0_13 = arith.constant 0 : index
    %c0_14 = arith.constant 0 : index
    %c0_15 = arith.constant 0 : index
    %c0_16 = arith.constant 0 : index
    %29 = vector.load %arg11[%c0_13, %c0_14, %c0_15, %c0_16] : memref<1x4x128x128xf32, #tpu.memory_space<vmem>>, vector<1x1x128x128xf32>
    %30 = vector.shape_cast %29 : vector<1x1x128x128xf32> to vector<128x128xf32>
    %31 = vector.shape_cast %28 : vector<128x128xf32> to vector<1x1x128x128xf32>
    tpu.vector_store %arg11[%c0_13, %c0_14, %c0_15, %c0_16], %31 {strides = array<i32>} : memref<1x4x128x128xf32, #tpu.memory_space<vmem>>, vector<1x1x128x128xf32>,
    %32 = arith.truncf %28 : vector<128x128xf32> to vector<128x128xbf16>
    %cst_17 = arith.constant dense<0.000000e+00> : vector<128x32xf32>
    %33 = tpu.matmul %32, %17, %cst_17 {dimension_numbers = #tpu.dot_dimension_numbers<[1], [0], [0], [1], [0, 0, 1, 1], [], []>} : vector<128x128xbf16>, vector<128x32xbf16>, vector<128x32xf32> -> vector<128x32xf32>
    %34 = arith.truncf %33 : vector<128x32xf32> to vector<128x32xbf16>
    %c0_18 = arith.constant 0 : index
    %c0_19 = arith.constant 0 : index
    %35 = vector.load %arg8[%c0_18, %c0_19] : memref<128x128xbf16, #tpu.memory_space<vmem>>, vector<32x128xbf16>
    %cst_20 = arith.constant dense<0.000000e+00> : vector<128x128xf32>
    %36 = tpu.matmul %34, %35, %cst_20 {dimension_numbers = #tpu.dot_dimension_numbers<[1], [0], [0], [1], [0, 0, 1, 1], [], []>} : vector<128x32xbf16>, vector<32x128xbf16>, vector<128x128xf32> -> vector<128x128xf32>
    %37 = vector.extract_strided_slice %13 {offsets = [0, 32], sizes = [128, 32], strides = [1, 1]} : vector<128x128xbf16> to vector<128x32xbf16>
    %38 = vector.extract_strided_slice %14 {offsets = [0, 32], sizes = [128, 32], strides = [1, 1]} : vector<128x256xbf16> to vector<128x32xbf16>
    %39 = vector.extract_strided_slice %14 {offsets = [0, 160], sizes = [128, 32], strides = [1, 1]} : vector<128x256xbf16> to vector<128x32xbf16>
    %cst_21 = arith.constant dense<0.000000e+00> : vector<128x128xf32>
    %40 = tpu.matmul %37, %38, %cst_21 {dimension_numbers = #tpu.dot_dimension_numbers<[1], [1], [0], [0], [0, 0, 1, 0], [], []>} : vector<128x32xbf16>, vector<128x32xbf16>, vector<128x128xf32> -> vector<128x128xf32>
    %cst_22 = arith.constant dense<0xFF800000> : vector<128xf32>
    %41 = vector.multi_reduction <maximumf>, %40, %cst_22 [1] : vector<128x128xf32> to vector<128xf32>
    %42 = vector.shape_cast %41 : vector<128xf32> to vector<128x1xf32>
    %43 = vector.broadcast %42 : vector<128x1xf32> to vector<128x128xf32>
    %44 = arith.subf %40, %43 : vector<128x128xf32>
    %45 = math.exp %44 : vector<128x128xf32>
    %cst_23 = arith.constant dense<0.000000e+00> : vector<128xf32>
    %46 = vector.multi_reduction <add>, %45, %cst_23 [1] : vector<128x128xf32> to vector<128xf32>
    %47 = vector.shape_cast %46 : vector<128xf32> to vector<128x1xf32>
    %48 = tpu.reciprocal %47 {approx = true} : vector<128x1xf32> -> vector<128x1xf32>
    %49 = vector.broadcast %48 : vector<128x1xf32> to vector<128x128xf32>
    %50 = arith.mulf %45, %49 : vector<128x128xf32>
    %c0_24 = arith.constant 0 : index
    %c1 = arith.constant 1 : index
    %c0_25 = arith.constant 0 : index
    %c0_26 = arith.constant 0 : index
    %51 = vector.load %arg11[%c0_24, %c1, %c0_25, %c0_26] : memref<1x4x128x128xf32, #tpu.memory_space<vmem>>, vector<1x1x128x128xf32>
    %52 = vector.shape_cast %51 : vector<1x1x128x128xf32> to vector<128x128xf32>
    %53 = vector.shape_cast %50 : vector<128x128xf32> to vector<1x1x128x128xf32>
    tpu.vector_store %arg11[%c0_24, %c1, %c0_25, %c0_26], %53 {strides = array<i32>} : memref<1x4x128x128xf32, #tpu.memory_space<vmem>>, vector<1x1x128x128xf32>,
    %54 = arith.truncf %50 : vector<128x128xf32> to vector<128x128xbf16>
    %cst_27 = arith.constant dense<0.000000e+00> : vector<128x32xf32>
    %55 = tpu.matmul %54, %39, %cst_27 {dimension_numbers = #tpu.dot_dimension_numbers<[1], [0], [0], [1], [0, 0, 1, 1], [], []>} : vector<128x128xbf16>, vector<128x32xbf16>, vector<128x32xf32> -> vector<128x32xf32>
    %56 = arith.truncf %55 : vector<128x32xf32> to vector<128x32xbf16>
    %c32 = arith.constant 32 : index
    %c0_28 = arith.constant 0 : index
    %57 = vector.load %arg8[%c32, %c0_28] : memref<128x128xbf16, #tpu.memory_space<vmem>>, vector<32x128xbf16>
    %cst_29 = arith.constant dense<0.000000e+00> : vector<128x128xf32>
    %58 = tpu.matmul %56, %57, %cst_29 {dimension_numbers = #tpu.dot_dimension_numbers<[1], [0], [0], [1], [0, 0, 1, 1], [], []>} : vector<128x32xbf16>, vector<32x128xbf16>, vector<128x128xf32> -> vector<128x128xf32>
    %59 = arith.addf %36, %58 : vector<128x128xf32>
    %60 = vector.extract_strided_slice %13 {offsets = [0, 64], sizes = [128, 32], strides = [1, 1]} : vector<128x128xbf16> to vector<128x32xbf16>
    %61 = vector.extract_strided_slice %14 {offsets = [0, 64], sizes = [128, 32], strides = [1, 1]} : vector<128x256xbf16> to vector<128x32xbf16>
    %62 = vector.extract_strided_slice %14 {offsets = [0, 192], sizes = [128, 32], strides = [1, 1]} : vector<128x256xbf16> to vector<128x32xbf16>
    %cst_30 = arith.constant dense<0.000000e+00> : vector<128x128xf32>
    %63 = tpu.matmul %60, %61, %cst_30 {dimension_numbers = #tpu.dot_dimension_numbers<[1], [1], [0], [0], [0, 0, 1, 0], [], []>} : vector<128x32xbf16>, vector<128x32xbf16>, vector<128x128xf32> -> vector<128x128xf32>
    %cst_31 = arith.constant dense<0xFF800000> : vector<128xf32>
    %64 = vector.multi_reduction <maximumf>, %63, %cst_31 [1] : vector<128x128xf32> to vector<128xf32>
    %65 = vector.shape_cast %64 : vector<128xf32> to vector<128x1xf32>
    %66 = vector.broadcast %65 : vector<128x1xf32> to vector<128x128xf32>
    %67 = arith.subf %63, %66 : vector<128x128xf32>
    %68 = math.exp %67 : vector<128x128xf32>
    %cst_32 = arith.constant dense<0.000000e+00> : vector<128xf32>
    %69 = vector.multi_reduction <add>, %68, %cst_32 [1] : vector<128x128xf32> to vector<128xf32>
    %70 = vector.shape_cast %69 : vector<128xf32> to vector<128x1xf32>
    %71 = tpu.reciprocal %70 {approx = true} : vector<128x1xf32> -> vector<128x1xf32>
    %72 = vector.broadcast %71 : vector<128x1xf32> to vector<128x128xf32>
    %73 = arith.mulf %68, %72 : vector<128x128xf32>
    %c0_33 = arith.constant 0 : index
    %c2 = arith.constant 2 : index
    %c0_34 = arith.constant 0 : index
    %c0_35 = arith.constant 0 : index
    %74 = vector.load %arg11[%c0_33, %c2, %c0_34, %c0_35] : memref<1x4x128x128xf32, #tpu.memory_space<vmem>>, vector<1x1x128x128xf32>
    %75 = vector.shape_cast %74 : vector<1x1x128x128xf32> to vector<128x128xf32>
    %76 = vector.shape_cast %73 : vector<128x128xf32> to vector<1x1x128x128xf32>
    tpu.vector_store %arg11[%c0_33, %c2, %c0_34, %c0_35], %76 {strides = array<i32>} : memref<1x4x128x128xf32, #tpu.memory_space<vmem>>, vector<1x1x128x128xf32>,
    %77 = arith.truncf %73 : vector<128x128xf32> to vector<128x128xbf16>
    %cst_36 = arith.constant dense<0.000000e+00> : vector<128x32xf32>
    %78 = tpu.matmul %77, %62, %cst_36 {dimension_numbers = #tpu.dot_dimension_numbers<[1], [0], [0], [1], [0, 0, 1, 1], [], []>} : vector<128x128xbf16>, vector<128x32xbf16>, vector<128x32xf32> -> vector<128x32xf32>
    %79 = arith.truncf %78 : vector<128x32xf32> to vector<128x32xbf16>
    %c64 = arith.constant 64 : index
    %c0_37 = arith.constant 0 : index
    %80 = vector.load %arg8[%c64, %c0_37] : memref<128x128xbf16, #tpu.memory_space<vmem>>, vector<32x128xbf16>
    %cst_38 = arith.constant dense<0.000000e+00> : vector<128x128xf32>
    %81 = tpu.matmul %79, %80, %cst_38 {dimension_numbers = #tpu.dot_dimension_numbers<[1], [0], [0], [1], [0, 0, 1, 1], [], []>} : vector<128x32xbf16>, vector<32x128xbf16>, vector<128x128xf32> -> vector<128x128xf32>
    %82 = arith.addf %59, %81 : vector<128x128xf32>
    %83 = vector.extract_strided_slice %13 {offsets = [0, 96], sizes = [128, 32], strides = [1, 1]} : vector<128x128xbf16> to vector<128x32xbf16>
    %84 = vector.extract_strided_slice %14 {offsets = [0, 96], sizes = [128, 32], strides = [1, 1]} : vector<128x256xbf16> to vector<128x32xbf16>
    %85 = vector.extract_strided_slice %14 {offsets = [0, 224], sizes = [128, 32], strides = [1, 1]} : vector<128x256xbf16> to vector<128x32xbf16>
    %cst_39 = arith.constant dense<0.000000e+00> : vector<128x128xf32>
    %86 = tpu.matmul %83, %84, %cst_39 {dimension_numbers = #tpu.dot_dimension_numbers<[1], [1], [0], [0], [0, 0, 1, 0], [], []>} : vector<128x32xbf16>, vector<128x32xbf16>, vector<128x128xf32> -> vector<128x128xf32>
    %cst_40 = arith.constant dense<0xFF800000> : vector<128xf32>
    %87 = vector.multi_reduction <maximumf>, %86, %cst_40 [1] : vector<128x128xf32> to vector<128xf32>
    %88 = vector.shape_cast %87 : vector<128xf32> to vector<128x1xf32>
    %89 = vector.broadcast %88 : vector<128x1xf32> to vector<128x128xf32>
    %90 = arith.subf %86, %89 : vector<128x128xf32>
    %91 = math.exp %90 : vector<128x128xf32>
    %cst_41 = arith.constant dense<0.000000e+00> : vector<128xf32>
    %92 = vector.multi_reduction <add>, %91, %cst_41 [1] : vector<128x128xf32> to vector<128xf32>
    %93 = vector.shape_cast %92 : vector<128xf32> to vector<128x1xf32>
    %94 = tpu.reciprocal %93 {approx = true} : vector<128x1xf32> -> vector<128x1xf32>
    %95 = vector.broadcast %94 : vector<128x1xf32> to vector<128x128xf32>
    %96 = arith.mulf %91, %95 : vector<128x128xf32>
    %c0_42 = arith.constant 0 : index
    %c3 = arith.constant 3 : index
    %c0_43 = arith.constant 0 : index
    %c0_44 = arith.constant 0 : index
    %97 = vector.load %arg11[%c0_42, %c3, %c0_43, %c0_44] : memref<1x4x128x128xf32, #tpu.memory_space<vmem>>, vector<1x1x128x128xf32>
    %98 = vector.shape_cast %97 : vector<1x1x128x128xf32> to vector<128x128xf32>
    %99 = vector.shape_cast %96 : vector<128x128xf32> to vector<1x1x128x128xf32>
    tpu.vector_store %arg11[%c0_42, %c3, %c0_43, %c0_44], %99 {strides = array<i32>} : memref<1x4x128x128xf32, #tpu.memory_space<vmem>>, vector<1x1x128x128xf32>,
    %100 = arith.truncf %96 : vector<128x128xf32> to vector<128x128xbf16>
    %cst_45 = arith.constant dense<0.000000e+00> : vector<128x32xf32>
    %101 = tpu.matmul %100, %85, %cst_45 {dimension_numbers = #tpu.dot_dimension_numbers<[1], [0], [0], [1], [0, 0, 1, 1], [], []>} : vector<128x128xbf16>, vector<128x32xbf16>, vector<128x32xf32> -> vector<128x32xf32>
    %102 = arith.truncf %101 : vector<128x32xf32> to vector<128x32xbf16>
    %c96 = arith.constant 96 : index
    %c0_46 = arith.constant 0 : index
    %103 = vector.load %arg8[%c96, %c0_46] : memref<128x128xbf16, #tpu.memory_space<vmem>>, vector<32x128xbf16>
    %cst_47 = arith.constant dense<0.000000e+00> : vector<128x128xf32>
    %104 = tpu.matmul %102, %103, %cst_47 {dimension_numbers = #tpu.dot_dimension_numbers<[1], [0], [0], [1], [0, 0, 1, 1], [], []>} : vector<128x32xbf16>, vector<32x128xbf16>, vector<128x128xf32> -> vector<128x128xf32>
    %105 = arith.addf %82, %104 : vector<128x128xf32>
    %c0_48 = arith.constant 0 : index
    %c0_49 = arith.constant 0 : index
    %106 = vector.load %arg9[%c0_48, %c0_49] : memref<1x128xf32, #tpu.memory_space<vmem>>, vector<1x128xf32>
    %107 = vector.broadcast %106 : vector<1x128xf32> to vector<128x128xf32>
    %108 = arith.addf %105, %107 : vector<128x128xf32>
    %c0_50 = arith.constant 0 : index
    %c0_51 = arith.constant 0 : index
    %c0_52 = arith.constant 0 : index
    %109 = vector.load %arg10[%c0_50, %c0_51, %c0_52] : memref<1x128x128xf32, #tpu.memory_space<vmem>>, vector<1x128x128xf32>
    %110 = vector.shape_cast %109 : vector<1x128x128xf32> to vector<128x128xf32>
    %111 = vector.shape_cast %108 : vector<128x128xf32> to vector<1x128x128xf32>
    tpu.vector_store %arg10[%c0_50, %c0_51, %c0_52], %111 {strides = array<i32>} : memref<1x128x128xf32, #tpu.memory_space<vmem>>, vector<1x128x128xf32>,
    return
  }
  func.func @transform_0(%arg0: i32, %arg1: i32) -> (i32, i32, i32) {
    %c0_i32 = arith.constant 0 : i32
    %c0_i32_0 = arith.constant 0 : i32
    return %arg0, %arg1, %c0_i32 : i32, i32, i32
  }
  func.func @transform_1(%arg0: i32, %arg1: i32) -> (i32, i32, i32) {
    %c0_i32 = arith.constant 0 : i32
    %c0_i32_0 = arith.constant 0 : i32
    %c0_i32_1 = arith.constant 0 : i32
    return %arg0, %c0_i32, %c0_i32_0 : i32, i32, i32
  }
  func.func @transform_2(%arg0: i32, %arg1: i32) -> (i32, i32) {
    %c0_i32 = arith.constant 0 : i32
    %c0_i32_0 = arith.constant 0 : i32
    %c0_i32_1 = arith.constant 0 : i32
    return %c0_i32, %c0_i32_0 : i32, i32
  }
  func.func @transform_3(%arg0: i32, %arg1: i32) -> (i32, i32) {
    %c0_i32 = arith.constant 0 : i32
    %c0_i32_0 = arith.constant 0 : i32
    %c0_i32_1 = arith.constant 0 : i32
    return %c0_i32, %c0_i32_0 : i32, i32
  }
  func.func @transform_4(%arg0: i32, %arg1: i32) -> (i32, i32) {
    %c0_i32 = arith.constant 0 : i32
    %c0_i32_0 = arith.constant 0 : i32
    %c0_i32_1 = arith.constant 0 : i32
    return %c0_i32, %c0_i32_0 : i32, i32
  }
  func.func @transform_5(%arg0: i32, %arg1: i32) -> (i32, i32) {
    %c0_i32 = arith.constant 0 : i32
    %c0_i32_0 = arith.constant 0 : i32
    %c0_i32_1 = arith.constant 0 : i32
    return %c0_i32, %c0_i32_0 : i32, i32
  }
  func.func @transform_6(%arg0: i32, %arg1: i32) -> (i32, i32) {
    %c0_i32 = arith.constant 0 : i32
    %c0_i32_0 = arith.constant 0 : i32
    %c0_i32_1 = arith.constant 0 : i32
    return %c0_i32, %c0_i32_0 : i32, i32
  }
  func.func @transform_7(%arg0: i32, %arg1: i32) -> (i32, i32) {
    %c0_i32 = arith.constant 0 : i32
    %c0_i32_0 = arith.constant 0 : i32
    %c0_i32_1 = arith.constant 0 : i32
    return %c0_i32, %c0_i32_0 : i32, i32
  }
  func.func @transform_8(%arg0: i32, %arg1: i32) -> (i32, i32, i32) {
    %c0_i32 = arith.constant 0 : i32
    %c0_i32_0 = arith.constant 0 : i32
    return %arg0, %arg1, %c0_i32 : i32, i32, i32
  }
  func.func @transform_9(%arg0: i32, %arg1: i32) -> (i32, i32, i32, i32) {
    %c0_i32 = arith.constant 0 : i32
    %c0_i32_0 = arith.constant 0 : i32
    %c0_i32_1 = arith.constant 0 : i32
    return %arg0, %c0_i32, %arg1, %c0_i32_0 : i32, i32, i32, i32
  }
}

</mosaic_0001>

<llo_original>
// kernel: tpu_custom_call.1
$region0: #{tpu_custom_call.1}
  #allocation0 [shape = 'u32[]', space=smem, size = 0x4, offset = 0x4, fixed_abs, tag = 'smem constant byte address 0x4 - core index']
  #allocation1 [shape = 'u32[72,128]{1,0:T(1,128)}', space=vmem, size = 0x9000, scoped, tag = 'internal scratch']
  #allocation2 [shape = 'bf16[128,256]{1,0:T(8,128)(2,1)}', space=vmem, size = 0x10000, scoped, tag = 'scratch operand']
  %s0 = inlined_call_operand.hbm [shape: f32[2,128,128], index: 0, kind: input, shape index: {}]
  %s1 = inlined_call_operand.hbm [shape: f32[2,128,128], index: 1, kind: input, shape index: {}]
  %s2 = inlined_call_operand.hbm [shape: bf16[128,128], index: 2, kind: input, shape index: {}]
  %s3 = inlined_call_operand.vmem [shape: f32[1,128], index: 3, kind: input, shape index: {}]
  %s4 = inlined_call_operand.hbm [shape: bf16[128,256], index: 4, kind: input, shape index: {}]
  %s5 = inlined_call_operand.vmem [shape: f32[1,256], index: 5, kind: input, shape index: {}]
  %s6 = inlined_call_operand.hbm [shape: bf16[128,128], index: 6, kind: input, shape index: {}]
  %s7 = inlined_call_operand.vmem [shape: f32[1,128], index: 7, kind: input, shape index: {}]
  %s8 = inlined_call_operand.hbm [shape: f32[2,128,128], index: 8, kind: output, shape index: {0}]
  %s9 = inlined_call_operand.hbm [shape: f32[2,4,128,128], index: 9, kind: output, shape index: {1}]
  %10 = xla_tuple %s8, %s9
  %s11 = sld [smem:[#allocation0]]
  $region97: #{tpu_custom_call.1} parent=0
    _
  %s13 = ssub.s32 1, %s11
  %s14 = scalar_select 0, %s13, %s11
  $region1: #{tpu_custom_call.1} parent=0
    #allocation3 [shape = 'u8[131072]{0}', space=vmem, size = 0x20000, scoped, tag = 'input window, operand 0']
    #allocation4 [shape = 's32[2]{0}', space=sflag, size = 0x8, scoped, tag = 'scoped memory for tpu_custom_call.1']
    #allocation5 [shape = 's32[2]{0}', space=sflag, size = 0x8, scoped, tag = 'scoped memory for tpu_custom_call.1']
    #allocation6 [shape = 'u8[131072]{0}', space=vmem, size = 0x20000, scoped, tag = 'input window, operand 1']
    #allocation7 [shape = 's32[2]{0}', space=sflag, size = 0x8, scoped, tag = 'scoped memory for tpu_custom_call.1']
    #allocation8 [shape = 'u8[32768]{0}', space=vmem, size = 0x8000, scoped, tag = 'input window, operand 2, single buffered']
    #allocation9 [shape = 'u8[65536]{0}', space=vmem, size = 0x10000, scoped, tag = 'input window, operand 4, single buffered']
    #allocation10 [shape = 's32[1]{0}', space=sflag, size = 0x4, scoped, tag = 'scoped memory for tpu_custom_call.1']
    #allocation11 [shape = 'u8[32768]{0}', space=vmem, size = 0x8000, scoped, tag = 'input window, operand 6, single buffered']
    #allocation12 [shape = 'u8[131072]{0}', space=vmem, size = 0x20000, scoped, tag = 'output window, operand 0']
    #allocation13 [shape = 'u8[524288]{0}', space=vmem, size = 0x80000, scoped, tag = 'output window, operand 1']
    #allocation14 [shape = 's32[2]{0}', space=sflag, size = 0x8, scoped, tag = 'scoped memory for tpu_custom_call.1']
    %15 = vsyncpa [#allocation4], 0
    %s16 = scalar_lea.sflag [#allocation4], 1
    %17 = vsyncpa %s16, 0
    %18 = vsyncpa [#allocation7], 0
    %s19 = scalar_lea.sflag [#allocation7], 1
    %20 = vsyncpa %s19, 0
    %21 = vsyncpa [#allocation10], 0
    %22 = vsyncpa [#allocation5], 0
    %s23 = scalar_lea.sflag [#allocation5], 1
    %24 = vsyncpa %s23, 0
    %25 = vsyncpa [#allocation14], 0
    %s26 = scalar_lea.sflag [#allocation14], 1
    %27 = vsyncpa %s26, 0
    loop: start=0, step=1, limit=4
    $region2: #{tpu_custom_call.1} parent=1 // loop_pre_header
      _
    $region3: #{tpu_custom_call.1} parent=1 // loop_header
      %s29 = sphi 0, %s33
      %p30 = scmp.ge.s32.totalorder %s29, 4
      %s36 = sphi 0, %s48
      %s37 = sphi 0, %s44
      %s38 = sphi 0, %s36
      %s39 = sphi 0, %s37
      %s40 = sphi 0, %s38
      %s41 = sphi 0, %s39
      %s53 = sphi 0, %s55
      %s56 = sphi 0, %s53
      %s57 = sphi 0, %s56
      %s73 = sphi 0, %s57
      %s79 = sphi 0, %s81
      %s82 = sphi 0, %s79
      %s83 = sphi 0, %s82
      %s99 = sphi 0, %s83
      %s103 = sphi 0, %s103
      %s105 = sphi 0, %s103
      %s106 = sphi 0, %s105
      %s120 = sphi 0, %s106
      %s124 = sphi 0, %s124
      %s126 = sphi 0, %s124
      %s127 = sphi 0, %s126
      %s141 = sphi 0, %s127
      %s145 = sphi 0, %s145
      %s147 = sphi 0, %s145
      %s148 = sphi 0, %s147
      %s162 = sphi 0, %s148
      %s166 = sphi 0, %s166
      %s168 = sphi 0, %s166
      %s169 = sphi 0, %s168
      %s183 = sphi 0, %s169
      %s187 = sphi 0, %s187
      %s189 = sphi 0, %s187
      %s190 = sphi 0, %s189
      %s204 = sphi 0, %s190
      %s208 = sphi 0, %s208
      %s210 = sphi 0, %s208
      %s211 = sphi 0, %s210
      %s225 = sphi 0, %s211
      %s233 = sphi 0, %s235
      %s236 = sphi 0, %s233
      %s237 = sphi 0, %s236
      %s253 = sphi 0, %s237
      %s261 = sphi 0, %s263
      %s264 = sphi 0, %s261
      %s265 = sphi 0, %s264
      %s281 = sphi 0, %s265
    $region4: #{tpu_custom_call.1} parent=1 // loop_header_branch
      %32 = sbr.rel (%p30) target = $region8
    $region5: #{tpu_custom_call.1} parent=1 // loop_body
      %s34 = ssub.s32 %s29, 1
      %s35 = ssub.s32 %s29, 2
      %s42 = sadd.s32 1, %s37
      %p43 = scmp.ge.s32.totalorder %s42, 1
      %s44 = scalar_select %p43, 0, %s42
      %s45 = sadd.s32 1, %s36
      %s46 = scalar_select %p43, %s45, %s36
      %p47 = scmp.ge.s32.totalorder %s46, 2
      %s48 = scalar_select %p47, 0, %s46
      %s49 = ssub.s32 %s36, %s48
      %s50 = ssub.s32 %s37, %s44
      %s51 = sor.u32 %s49, %s50
      %p52 = scmp.eq.s32.totalorder %s51, 0
      %s54 = sadd.s32 %s53, 1
      %s55 = scalar_select %p52, %s53, %s54
      %p58 = pneg %p52
      %p59 = scmp.eq.s32.totalorder %s29, 1
      %p60 = por %p58, %p59
      %p61 = scmp.ne.s32.totalorder %s53, %s56
      %p62 = scmp.eq.s32.totalorder %s29, 0
      %p63 = por %p61, %p62
      %p64 = scmp.ne.s32.totalorder %s53, %s56
      %p65 = scmp.eq.s32.totalorder %s34, 1
      %p66 = por %p64, %p65
      %p67 = scmp.ne.s32.totalorder %s56, %s57
      %p68 = scmp.eq.s32.totalorder %s34, 0
      %p69 = por %p67, %p68
      %p70 = scmp.ne.s32.totalorder %s56, %s57
      %p71 = scmp.eq.s32.totalorder %s35, 1
      %p72 = por %p70, %p71
      %p74 = scmp.ne.s32.totalorder %s57, %s73
      %p75 = scmp.eq.s32.totalorder %s35, 0
      %p76 = por %p74, %p75
      %s77 = ssub.s32 %s36, %s48
      %p78 = scmp.eq.s32.totalorder %s77, 0
      %s80 = sadd.s32 %s79, 1
      %s81 = scalar_select %p78, %s79, %s80
      %p84 = pneg %p78
      %p85 = scmp.eq.s32.totalorder %s29, 1
      %p86 = por %p84, %p85
      %p87 = scmp.ne.s32.totalorder %s79, %s82
      %p88 = scmp.eq.s32.totalorder %s29, 0
      %p89 = por %p87, %p88
      %p90 = scmp.ne.s32.totalorder %s79, %s82
      %p91 = scmp.eq.s32.totalorder %s34, 1
      %p92 = por %p90, %p91
      %p93 = scmp.ne.s32.totalorder %s82, %s83
      %p94 = scmp.eq.s32.totalorder %s34, 0
      %p95 = por %p93, %p94
      %p96 = scmp.ne.s32.totalorder %s82, %s83
      %p97 = scmp.eq.s32.totalorder %s35, 1
      %p98 = por %p96, %p97
      %p100 = scmp.ne.s32.totalorder %s83, %s99
      %p101 = scmp.eq.s32.totalorder %s35, 0
      %p102 = por %p100, %p101
      %s104 = sadd.s32 %s103, 1
      %p107 = scmp.eq.s32.totalorder %s29, 1
      %p108 = scmp.ne.s32.totalorder %s103, %s105
      %p109 = scmp.eq.s32.totalorder %s29, 0
      %p110 = por %p108, %p109
      %p111 = scmp.ne.s32.totalorder %s103, %s105
      %p112 = scmp.eq.s32.totalorder %s34, 1
      %p113 = por %p111, %p112
      %p114 = scmp.ne.s32.totalorder %s105, %s106
      %p115 = scmp.eq.s32.totalorder %s34, 0
      %p116 = por %p114, %p115
      %p117 = scmp.ne.s32.totalorder %s105, %s106
      %p118 = scmp.eq.s32.totalorder %s35, 1
      %p119 = por %p117, %p118
      %p121 = scmp.ne.s32.totalorder %s106, %s120
      %p122 = scmp.eq.s32.totalorder %s35, 0
      %p123 = por %p121, %p122
      %s125 = sadd.s32 %s124, 1
      %p128 = scmp.eq.s32.totalorder %s29, 1
      %p129 = scmp.ne.s32.totalorder %s124, %s126
      %p130 = scmp.eq.s32.totalorder %s29, 0
      %p131 = por %p129, %p130
      %p132 = scmp.ne.s32.totalorder %s124, %s126
      %p133 = scmp.eq.s32.totalorder %s34, 1
      %p134 = por %p132, %p133
      %p135 = scmp.ne.s32.totalorder %s126, %s127
      %p136 = scmp.eq.s32.totalorder %s34, 0
      %p137 = por %p135, %p136
      %p138 = scmp.ne.s32.totalorder %s126, %s127
      %p139 = scmp.eq.s32.totalorder %s35, 1
      %p140 = por %p138, %p139
      %p142 = scmp.ne.s32.totalorder %s127, %s141
      %p143 = scmp.eq.s32.totalorder %s35, 0
      %p144 = por %p142, %p143
      %s146 = sadd.s32 %s145, 1
      %p149 = scmp.eq.s32.totalorder %s29, 1
      %p150 = scmp.ne.s32.totalorder %s145, %s147
      %p151 = scmp.eq.s32.totalorder %s29, 0
      %p152 = por %p150, %p151
      %p153 = scmp.ne.s32.totalorder %s145, %s147
      %p154 = scmp.eq.s32.totalorder %s34, 1
      %p155 = por %p153, %p154
      %p156 = scmp.ne.s32.totalorder %s147, %s148
      %p157 = scmp.eq.s32.totalorder %s34, 0
      %p158 = por %p156, %p157
      %p159 = scmp.ne.s32.totalorder %s147, %s148
      %p160 = scmp.eq.s32.totalorder %s35, 1
      %p161 = por %p159, %p160
      %p163 = scmp.ne.s32.totalorder %s148, %s162
      %p164 = scmp.eq.s32.totalorder %s35, 0
      %p165 = por %p163, %p164
      %s167 = sadd.s32 %s166, 1
      %p170 = scmp.eq.s32.totalorder %s29, 1
      %p171 = scmp.ne.s32.totalorder %s166, %s168
      %p172 = scmp.eq.s32.totalorder %s29, 0
      %p173 = por %p171, %p172
      %p174 = scmp.ne.s32.totalorder %s166, %s168
      %p175 = scmp.eq.s32.totalorder %s34, 1
      %p176 = por %p174, %p175
      %p177 = scmp.ne.s32.totalorder %s168, %s169
      %p178 = scmp.eq.s32.totalorder %s34, 0
      %p179 = por %p177, %p178
      %p180 = scmp.ne.s32.totalorder %s168, %s169
      %p181 = scmp.eq.s32.totalorder %s35, 1
      %p182 = por %p180, %p181
      %p184 = scmp.ne.s32.totalorder %s169, %s183
      %p185 = scmp.eq.s32.totalorder %s35, 0
      %p186 = por %p184, %p185
      %s188 = sadd.s32 %s187, 1
      %p191 = scmp.eq.s32.totalorder %s29, 1
      %p192 = scmp.ne.s32.totalorder %s187, %s189
      %p193 = scmp.eq.s32.totalorder %s29, 0
      %p194 = por %p192, %p193
      %p195 = scmp.ne.s32.totalorder %s187, %s189
      %p196 = scmp.eq.s32.totalorder %s34, 1
      %p197 = por %p195, %p196
      %p198 = scmp.ne.s32.totalorder %s189, %s190
      %p199 = scmp.eq.s32.totalorder %s34, 0
      %p200 = por %p198, %p199
      %p201 = scmp.ne.s32.totalorder %s189, %s190
      %p202 = scmp.eq.s32.totalorder %s35, 1
      %p203 = por %p201, %p202
      %p205 = scmp.ne.s32.totalorder %s190, %s204
      %p206 = scmp.eq.s32.totalorder %s35, 0
      %p207 = por %p205, %p206
      %s209 = sadd.s32 %s208, 1
      %p212 = scmp.eq.s32.totalorder %s29, 1
      %p213 = scmp.ne.s32.totalorder %s208, %s210
      %p214 = scmp.eq.s32.totalorder %s29, 0
      %p215 = por %p213, %p214
      %p216 = scmp.ne.s32.totalorder %s208, %s210
      %p217 = scmp.eq.s32.totalorder %s34, 1
      %p218 = por %p216, %p217
      %p219 = scmp.ne.s32.totalorder %s210, %s211
      %p220 = scmp.eq.s32.totalorder %s34, 0
      %p221 = por %p219, %p220
      %p222 = scmp.ne.s32.totalorder %s210, %s211
      %p223 = scmp.eq.s32.totalorder %s35, 1
      %p224 = por %p222, %p223
      %p226 = scmp.ne.s32.totalorder %s211, %s225
      %p227 = scmp.eq.s32.totalorder %s35, 0
      %p228 = por %p226, %p227
      %s229 = ssub.s32 %s36, %s48
      %s230 = ssub.s32 %s37, %s44
      %s231 = sor.u32 %s229, %s230
      %p232 = scmp.eq.s32.totalorder %s231, 0
      %s234 = sadd.s32 %s233, 1
      %s235 = scalar_select %p232, %s233, %s234
      %p238 = pneg %p232
      %p239 = scmp.eq.s32.totalorder %s29, 1
      %p240 = por %p238, %p239
      %p241 = scmp.ne.s32.totalorder %s233, %s236
      %p242 = scmp.eq.s32.totalorder %s29, 0
      %p243 = por %p241, %p242
      %p244 = scmp.ne.s32.totalorder %s233, %s236
      %p245 = scmp.eq.s32.totalorder %s34, 1
      %p246 = por %p244, %p245
      %p247 = scmp.ne.s32.totalorder %s236, %s237
      %p248 = scmp.eq.s32.totalorder %s34, 0
      %p249 = por %p247, %p248
      %p250 = scmp.ne.s32.totalorder %s236, %s237
      %p251 = scmp.eq.s32.totalorder %s35, 1
      %p252 = por %p250, %p251
      %p254 = scmp.ne.s32.totalorder %s237, %s253
      %p255 = scmp.eq.s32.totalorder %s35, 0
      %p256 = por %p254, %p255
      %s257 = ssub.s32 %s36, %s48
      %s258 = ssub.s32 %s37, %s44
      %s259 = sor.u32 %s257, %s258
      %p260 = scmp.eq.s32.totalorder %s259, 0
      %s262 = sadd.s32 %s261, 1
      %s263 = scalar_select %p260, %s261, %s262
      %p266 = pneg %p260
      %p267 = scmp.eq.s32.totalorder %s29, 1
      %p268 = por %p266, %p267
      %p269 = scmp.ne.s32.totalorder %s261, %s264
      %p270 = scmp.eq.s32.totalorder %s29, 0
      %p271 = por %p269, %p270
      %p272 = scmp.ne.s32.totalorder %s261, %s264
      %p273 = scmp.eq.s32.totalorder %s34, 1
      %p274 = por %p272, %p273
      %p275 = scmp.ne.s32.totalorder %s264, %s265
      %p276 = scmp.eq.s32.totalorder %s34, 0
      %p277 = por %p275, %p276
      %p278 = scmp.ne.s32.totalorder %s264, %s265
      %p279 = scmp.eq.s32.totalorder %s35, 1
      %p280 = por %p278, %p279
      %p282 = scmp.ne.s32.totalorder %s265, %s281
      %p283 = scmp.eq.s32.totalorder %s35, 0
      %p284 = por %p282, %p283
      %p285 = scmp.le.s32.totalorder 1, %s29
      %p286 = scmp.lt.s32.totalorder %s29, 3
      %p287 = pnand %p285, %p286
      %p288 = pneg %p287
      // Predicated region
      $region9: #{tpu_custom_call.1} parent=5 // pred_check
        _
      $region10: #{tpu_custom_call.1} parent=5 // pred_check_branch
        %290 = sbr.rel (%p287) target = $region12
      $region11: #{tpu_custom_call.1} parent=5 // pred_region
        %s291 = ssub.s32 %s29, 1
        // Predicated region
        $region13: #{tpu_custom_call.1} parent=11 // pred_check
          %p292 = pneg %p116
        $region14: #{tpu_custom_call.1} parent=11 // pred_check_branch
          %294 = sbr.rel (%p292) target = $region16
        $region15: #{tpu_custom_call.1} parent=11 // pred_region
          %296 = vsyncadd [#allocation7], 0
          %s297 = sshll.u32 %s2, 4
          %s298 = int_to_ptr.hbm [resolvable:$true] %s297
          %s299 = sshll.u32 [#allocation8], 4
          %s300 = int_to_ptr.vmem [resolvable:$true] %s299
          %305 = dma.hbm_to_vmem [thread:$0]  %s298, 1024, %s300, [#allocation7], 64, 64, 4
        $region16: #{tpu_custom_call.1} parent=11 // pred_fallthru
          _
        // Predicated region
        $region17: #{tpu_custom_call.1} parent=11 // pred_check
          %p306 = pneg %p137
        $region18: #{tpu_custom_call.1} parent=11 // pred_check_branch
          %308 = sbr.rel (%p306) target = $region20
        $region19: #{tpu_custom_call.1} parent=11 // pred_region
          _
        $region20: #{tpu_custom_call.1} parent=11 // pred_fallthru
          _
        // Predicated region
        $region21: #{tpu_custom_call.1} parent=11 // pred_check
          %p309 = pneg %p158
        $region22: #{tpu_custom_call.1} parent=11 // pred_check_branch
          %311 = sbr.rel (%p309) target = $region24
        $region23: #{tpu_custom_call.1} parent=11 // pred_region
          %313 = vsyncadd [#allocation10], 0
          %s314 = sshll.u32 %s4, 4
          %s315 = int_to_ptr.hbm [resolvable:$true] %s314
          %s316 = sshll.u32 [#allocation9], 4
          %s317 = int_to_ptr.vmem [resolvable:$true] %s316
          %322 = dma.hbm_to_vmem [thread:$0]  %s315, 2048, %s317, [#allocation10], 128, 128, 8
        $region24: #{tpu_custom_call.1} parent=11 // pred_fallthru
          _
        // Predicated region
        $region25: #{tpu_custom_call.1} parent=11 // pred_check
          %p323 = pneg %p179
        $region26: #{tpu_custom_call.1} parent=11 // pred_check_branch
          %325 = sbr.rel (%p323) target = $region28
        $region27: #{tpu_custom_call.1} parent=11 // pred_region
          _
        $region28: #{tpu_custom_call.1} parent=11 // pred_fallthru
          _
        // Predicated region
        $region29: #{tpu_custom_call.1} parent=11 // pred_check
          %p326 = pneg %p200
        $region30: #{tpu_custom_call.1} parent=11 // pred_check_branch
          %328 = sbr.rel (%p326) target = $region32
        $region31: #{tpu_custom_call.1} parent=11 // pred_region
          %330 = vsyncadd [#allocation10], 0
          %s331 = sshll.u32 %s6, 4
          %s332 = int_to_ptr.hbm [resolvable:$true] %s331
          %s333 = sshll.u32 [#allocation11], 4
          %s334 = int_to_ptr.vmem [resolvable:$true] %s333
          %339 = dma.hbm_to_vmem [thread:$0]  %s332, 1024, %s334, [#allocation10], 64, 64, 4
        $region32: #{tpu_custom_call.1} parent=11 // pred_fallthru
          _
        // Predicated region
        $region33: #{tpu_custom_call.1} parent=11 // pred_check
          %p340 = pneg %p221
        $region34: #{tpu_custom_call.1} parent=11 // pred_check_branch
          %342 = sbr.rel (%p340) target = $region36
        $region35: #{tpu_custom_call.1} parent=11 // pred_region
          _
        $region36: #{tpu_custom_call.1} parent=11 // pred_fallthru
          _
      $region12: #{tpu_custom_call.1} parent=5 // pred_fallthru
        _
      %p343 = scmp.lt.s32.totalorder %s29, 2
      // Predicated region
      $region37: #{tpu_custom_call.1} parent=5 // pred_check
        %p344 = pneg %p343
      $region38: #{tpu_custom_call.1} parent=5 // pred_check_branch
        %346 = sbr.rel (%p344) target = $region40
      $region39: #{tpu_custom_call.1} parent=5 // pred_region
        // Predicated region
        $region41: #{tpu_custom_call.1} parent=39 // pred_check
          %p347 = pneg %p63
        $region42: #{tpu_custom_call.1} parent=39 // pred_check_branch
          %349 = sbr.rel (%p347) target = $region44
        $region43: #{tpu_custom_call.1} parent=39 // pred_region
          %s350 = sand.u32 %s53, 1
          %s351 = scalar_lea.sflag [#allocation4], %s350
          %s352 = sand.u32 %s53, 1
          %s353 = smul.addr %s352, 128
          %s354 = scalar_lea.vmem [#allocation3], %s353
          %s355 = smul.u32 16, %s37
          %357 = vsyncadd %s351, 0
          %s358 = smul.addr %s36, 16
          %s359 = sadd.s32 %s355, %s358
          %s360 = smul.addr %s359, 8
          %s361 = scalar_lea.hbm %s0, %s360
          %s362 = sshll.u32 %s361, 4
          %s363 = int_to_ptr.hbm [resolvable:$true] %s362
          %s364 = sshll.u32 %s354, 4
          %s365 = int_to_ptr.vmem [resolvable:$true] %s364
          %370 = dma.hbm_to_vmem [thread:$0]  %s363, 2048, %s365, %s351, 128, 128, 8
        $region44: #{tpu_custom_call.1} parent=39 // pred_fallthru
          _
        // Predicated region
        $region45: #{tpu_custom_call.1} parent=39 // pred_check
          %p371 = pneg %p89
        $region46: #{tpu_custom_call.1} parent=39 // pred_check_branch
          %373 = sbr.rel (%p371) target = $region48
        $region47: #{tpu_custom_call.1} parent=39 // pred_region
          %s374 = sand.u32 %s29, 1
          %s375 = scalar_lea.sflag [#allocation7], %s374
          %s376 = sand.u32 %s79, 1
          %s377 = smul.addr %s376, 128
          %s378 = scalar_lea.vmem [#allocation6], %s377
          %380 = vsyncadd %s375, 0
          %s381 = smul.addr %s36, 16
          %s382 = smul.addr %s381, 8
          %s383 = scalar_lea.hbm %s1, %s382
          %s384 = sshll.u32 %s383, 4
          %s385 = int_to_ptr.hbm [resolvable:$true] %s384
          %s386 = sshll.u32 %s378, 4
          %s387 = int_to_ptr.vmem [resolvable:$true] %s386
          %392 = dma.hbm_to_vmem [thread:$0]  %s385, 2048, %s387, %s375, 128, 128, 8
        $region48: #{tpu_custom_call.1} parent=39 // pred_fallthru
          _
      $region40: #{tpu_custom_call.1} parent=5 // pred_fallthru
        _
      %p393 = scmp.le.s32.totalorder 1, %s29
      %p394 = scmp.lt.s32.totalorder %s29, 3
      %p395 = pnand %p393, %p394
      %p396 = pneg %p395
      // Predicated region
      $region49: #{tpu_custom_call.1} parent=5 // pred_check
        _
      $region50: #{tpu_custom_call.1} parent=5 // pred_check_branch
        %398 = sbr.rel (%p395) target = $region52
      $region51: #{tpu_custom_call.1} parent=5 // pred_region
        %s399 = ssub.s32 %s29, 1
        %s400 = sand.u32 %s56, 1
        %s401 = scalar_lea.sflag [#allocation4], %s400
        %s402 = sand.u32 %s56, 1
        %s403 = smul.addr %s402, 128
        %s404 = scalar_lea.vmem [#allocation3], %s403
        // Predicated region
        $region53: #{tpu_custom_call.1} parent=51 // pred_check
          %p405 = pneg %p69
        $region54: #{tpu_custom_call.1} parent=51 // pred_check_branch
          %407 = sbr.rel (%p405) target = $region56
        $region55: #{tpu_custom_call.1} parent=51 // pred_region
          %409 = dma.done %s401, 2048
        $region56: #{tpu_custom_call.1} parent=51 // pred_fallthru
          _
        %s410 = sand.u32 %s34, 1
        %s411 = scalar_lea.sflag [#allocation7], %s410
        %s412 = sand.u32 %s82, 1
        %s413 = smul.addr %s412, 128
        %s414 = scalar_lea.vmem [#allocation6], %s413
        // Predicated region
        $region57: #{tpu_custom_call.1} parent=51 // pred_check
          %p415 = pneg %p95
        $region58: #{tpu_custom_call.1} parent=51 // pred_check_branch
          %417 = sbr.rel (%p415) target = $region60
        $region59: #{tpu_custom_call.1} parent=51 // pred_region
          %419 = dma.done %s411, 2048
        $region60: #{tpu_custom_call.1} parent=51 // pred_fallthru
          _
        // Predicated region
        $region61: #{tpu_custom_call.1} parent=51 // pred_check
          %p420 = pneg %p116
        $region62: #{tpu_custom_call.1} parent=51 // pred_check_branch
          %422 = sbr.rel (%p420) target = $region64
        $region63: #{tpu_custom_call.1} parent=51 // pred_region
          %424 = dma.done [#allocation7], 1024
        $region64: #{tpu_custom_call.1} parent=51 // pred_fallthru
          _
        // Predicated region
        $region65: #{tpu_custom_call.1} parent=51 // pred_check
          %p425 = pneg %p158
        $region66: #{tpu_custom_call.1} parent=51 // pred_check_branch
          %427 = sbr.rel (%p425) target = $region68
        $region67: #{tpu_custom_call.1} parent=51 // pred_region
          %429 = dma.done [#allocation10], 2048
        $region68: #{tpu_custom_call.1} parent=51 // pred_fallthru
          _
        // Predicated region
        $region69: #{tpu_custom_call.1} parent=51 // pred_check
          %p430 = pneg %p200
        $region70: #{tpu_custom_call.1} parent=51 // pred_check_branch
          %432 = sbr.rel (%p430) target = $region72
        $region71: #{tpu_custom_call.1} parent=51 // pred_region
          %434 = dma.done [#allocation10], 1024
        $region72: #{tpu_custom_call.1} parent=51 // pred_fallthru
          _
        %s435 = sand.u32 %s56, 1
        %s436 = scalar_lea.sflag [#allocation4], %s435
        %s437 = sand.u32 %s56, 1
        %s438 = smul.addr %s437, 128
        %s439 = scalar_lea.vmem [#allocation3], %s438
        %p440 = pneg %p69
        %p441 = pneg %p66
        %s442 = sand.u32 %s34, 1
        %s443 = scalar_lea.sflag [#allocation7], %s442
        %s444 = sand.u32 %s82, 1
        %s445 = smul.addr %s444, 128
        %s446 = scalar_lea.vmem [#allocation6], %s445
        %p447 = pneg %p95
        %p448 = pneg %p92
        %p449 = pneg %p116
        %p450 = pneg %p113
        %p451 = pneg %p137
        %p452 = pneg %p134
        %p453 = pneg %p158
        %p454 = pneg %p155
        %p455 = pneg %p179
        %p456 = pneg %p176
        %p457 = pneg %p200
        %p458 = pneg %p197
        %p459 = pneg %p221
        %p460 = pneg %p218
        %p461 = pneg %p249
        %p462 = pneg %p246
        %s463 = sand.u32 %s236, 1
        %s464 = scalar_lea.sflag [#allocation5], %s463
        %s465 = sand.u32 %s236, 1
        %s466 = smul.addr %s465, 128
        %s467 = scalar_lea.vmem [#allocation12], %s466
        %p468 = pneg %p277
        %p469 = pneg %p274
        %s470 = sand.u32 %s264, 1
        %s471 = scalar_lea.sflag [#allocation14], %s470
        %s472 = sand.u32 %s264, 1
        %s473 = smul.addr %s472, 512
        %s474 = scalar_lea.vmem [#allocation13], %s473
        %s475 = smul.u32 16, %s39
        %s476 = smul.u32 16, %s39
        %s477 = smul.u32 16, %s39
        %p479 = scmp.eq.s32.totalorder %s39, 0
        // Predicated region
        $region73: #{tpu_custom_call.1} parent=51 // pred_check
          %p480 = pneg %p479
        $region74: #{tpu_custom_call.1} parent=51 // pred_check_branch
          %482 = sbr.rel (%p480) target = $region76
        $region75: #{tpu_custom_call.1} parent=51 // pred_region
          %v483 = vld [vmem:[%s414] sm:$0xff]
          %v484 = vld [vmem:[%s414 + $0x8] sm:$0xff]
          %v485 = vld [vmem:[%s414 + $0x10] sm:$0xff]
          %v486 = vld [vmem:[%s414 + $0x18] sm:$0xff]
          %v487 = vld [vmem:[%s414 + $0x20] sm:$0xff]
          %v488 = vld [vmem:[%s414 + $0x28] sm:$0xff]
          %v489 = vld [vmem:[%s414 + $0x30] sm:$0xff]
          %v490 = vld [vmem:[%s414 + $0x38] sm:$0xff]
          %v491 = vld [vmem:[%s414 + $0x40] sm:$0xff]
          %v492 = vld [vmem:[%s414 + $0x48] sm:$0xff]
          %v493 = vld [vmem:[%s414 + $0x50] sm:$0xff]
          %v494 = vld [vmem:[%s414 + $0x58] sm:$0xff]
          %v495 = vld [vmem:[%s414 + $0x60] sm:$0xff]
          %v496 = vld [vmem:[%s414 + $0x68] sm:$0xff]
          %v497 = vld [vmem:[%s414 + $0x70] sm:$0xff]
          %v498 = vld [vmem:[%s414 + $0x78] sm:$0xff]
          %v499 = vpack.c.bf16 %v484, %v483
          %v500 = vpack.c.bf16 %v486, %v485
          %v501 = vpack.c.bf16 %v488, %v487
          %v502 = vpack.c.bf16 %v490, %v489
          %v503 = vpack.c.bf16 %v492, %v491
          %v504 = vpack.c.bf16 %v494, %v493
          %v505 = vpack.c.bf16 %v496, %v495
          %v506 = vpack.c.bf16 %v498, %v497
          %v507 = vld [vmem:[#allocation9] sm:$0xff]
          %v508 = vld [vmem:[#allocation9 + $0x8] sm:$0xff]
          %v509 = vld [vmem:[#allocation9 + $0x10] sm:$0xff]
          %v510 = vld [vmem:[#allocation9 + $0x18] sm:$0xff]
          %v511 = vld [vmem:[#allocation9 + $0x20] sm:$0xff]
          %v512 = vld [vmem:[#allocation9 + $0x28] sm:$0xff]
          %v513 = vld [vmem:[#allocation9 + $0x30] sm:$0xff]
          %v514 = vld [vmem:[#allocation9 + $0x38] sm:$0xff]
          %v515 = vld [vmem:[#allocation9 + $0x40] sm:$0xff]
          %v516 = vld [vmem:[#allocation9 + $0x48] sm:$0xff]
          %v517 = vld [vmem:[#allocation9 + $0x50] sm:$0xff]
          %v518 = vld [vmem:[#allocation9 + $0x58] sm:$0xff]
          %v519 = vld [vmem:[#allocation9 + $0x60] sm:$0xff]
          %v520 = vld [vmem:[#allocation9 + $0x68] sm:$0xff]
          %v521 = vld [vmem:[#allocation9 + $0x70] sm:$0xff]
          %v522 = vld [vmem:[#allocation9 + $0x78] sm:$0xff]
          %v523 = vld [vmem:[%s5] sm:$0x3]
          %v525 = vperm.slane %v523, 0
          %v526 = vperm.slane %v523, 1
          %v545 = vunpack.c.l.b16 %v507
          %v546 = vunpack.c.h.b16 %v507
          %v547 = vunpack.c.l.b16 %v508
          %v548 = vunpack.c.h.b16 %v508
          %v549 = vunpack.c.l.b16 %v509
          %v550 = vunpack.c.h.b16 %v509
          %v551 = vunpack.c.l.b16 %v510
          %v552 = vunpack.c.h.b16 %v510
          %v553 = vunpack.c.l.b16 %v511
          %v554 = vunpack.c.h.b16 %v511
          %v555 = vunpack.c.l.b16 %v512
          %v556 = vunpack.c.h.b16 %v512
          %v557 = vunpack.c.l.b16 %v513
          %v558 = vunpack.c.h.b16 %v513
          %v559 = vunpack.c.l.b16 %v514
          %v560 = vunpack.c.h.b16 %v514
          %v561 = vunpack.c.l.b16 %v515
          %v562 = vunpack.c.h.b16 %v515
          %v563 = vunpack.c.l.b16 %v516
          %v564 = vunpack.c.h.b16 %v516
          %v565 = vunpack.c.l.b16 %v517
          %v566 = vunpack.c.h.b16 %v517
          %v567 = vunpack.c.l.b16 %v518
          %v568 = vunpack.c.h.b16 %v518
          %v569 = vunpack.c.l.b16 %v519
          %v570 = vunpack.c.h.b16 %v519
          %v571 = vunpack.c.l.b16 %v520
          %v572 = vunpack.c.h.b16 %v520
          %v573 = vunpack.c.l.b16 %v521
          %v574 = vunpack.c.h.b16 %v521
          %v575 = vunpack.c.l.b16 %v522
          %v576 = vunpack.c.h.b16 %v522
          %v577 = vpack.c.b16 %v547, %v545
          %v578 = vpack.c.b16 %v548, %v546
          %v579 = vpack.c.b16 %v551, %v549
          %v580 = vpack.c.b16 %v552, %v550
          %v581 = vpack.c.b16 %v555, %v553
          %v582 = vpack.c.b16 %v556, %v554
          %v583 = vpack.c.b16 %v559, %v557
          %v584 = vpack.c.b16 %v560, %v558
          %v585 = vpack.c.b16 %v563, %v561
          %v586 = vpack.c.b16 %v564, %v562
          %v587 = vpack.c.b16 %v567, %v565
          %v588 = vpack.c.b16 %v568, %v566
          %v589 = vpack.c.b16 %v571, %v569
          %v590 = vpack.c.b16 %v572, %v570
          %v591 = vpack.c.b16 %v575, %v573
          %v592 = vpack.c.b16 %v576, %v574
          %609 = vmatpush.bf16.msra.mxu0 %v591
          %610 = vmatpush.bf16.msra.mxu0 %v589
          %611 = vmatpush.bf16.msra.mxu0 %v587
          %612 = vmatpush.bf16.msra.mxu0 %v585
          %613 = vmatpush.bf16.msra.mxu0 %v583
          %614 = vmatpush.bf16.msra.mxu0 %v581
          %615 = vmatpush.bf16.msra.mxu0 %v579
          %616 = vmatpush.bf16.msra.mxu0 %v577
          %617 = vmatmul.bf16.gmra.mxu0 %v499
          %v618 = vpop.f32.mrf.mxu0
          %v619 = vadd.f32 %v525, %v618
          %v620 = vpop.f32.mrf.mxu0
          %v621 = vadd.f32 %v525, %v620
          %622 = vmatmul.bf16.gmra.mxu0 %v500
          %v623 = vpop.f32.mrf.mxu0
          %v624 = vadd.f32 %v525, %v623
          %v625 = vpop.f32.mrf.mxu0
          %v626 = vadd.f32 %v525, %v625
          %627 = vmatmul.bf16.gmra.mxu0 %v501
          %v628 = vpop.f32.mrf.mxu0
          %v629 = vadd.f32 %v525, %v628
          %v630 = vpop.f32.mrf.mxu0
          %v631 = vadd.f32 %v525, %v630
          %632 = vmatmul.bf16.gmra.mxu0 %v502
          %v633 = vpop.f32.mrf.mxu0
          %v634 = vadd.f32 %v525, %v633
          %v635 = vpop.f32.mrf.mxu0
          %v636 = vadd.f32 %v525, %v635
          %637 = vmatmul.bf16.gmra.mxu0 %v503
          %v638 = vpop.f32.mrf.mxu0
          %v639 = vadd.f32 %v525, %v638
          %v640 = vpop.f32.mrf.mxu0
          %v641 = vadd.f32 %v525, %v640
          %642 = vmatmul.bf16.gmra.mxu0 %v504
          %v643 = vpop.f32.mrf.mxu0
          %v644 = vadd.f32 %v525, %v643
          %v645 = vpop.f32.mrf.mxu0
          %v646 = vadd.f32 %v525, %v645
          %647 = vmatmul.bf16.gmra.mxu0 %v505
          %v648 = vpop.f32.mrf.mxu0
          %v649 = vadd.f32 %v525, %v648
          %v650 = vpop.f32.mrf.mxu0
          %v651 = vadd.f32 %v525, %v650
          %652 = vmatmul.bf16.gmra.mxu0 %v506
          %v653 = vpop.f32.mrf.mxu0
          %v654 = vadd.f32 %v525, %v653
          %v655 = vpop.f32.mrf.mxu0
          %v656 = vadd.f32 %v525, %v655
          %657 = vdwg.mxu0
          %658 = vmatpush.bf16.msra.mxu0 %v592
          %659 = vmatpush.bf16.msra.mxu0 %v590
          %660 = vmatpush.bf16.msra.mxu0 %v588
          %661 = vmatpush.bf16.msra.mxu0 %v586
          %662 = vmatpush.bf16.msra.mxu0 %v584
          %663 = vmatpush.bf16.msra.mxu0 %v582
          %664 = vmatpush.bf16.msra.mxu0 %v580
          %665 = vmatpush.bf16.msra.mxu0 %v578
          %666 = vmatmul.bf16.gmra.mxu0 %v499
          %v667 = vpop.f32.mrf.mxu0
          %v668 = vadd.f32 %v526, %v667
          %v669 = vpop.f32.mrf.mxu0
          %v670 = vadd.f32 %v526, %v669
          %671 = vmatmul.bf16.gmra.mxu0 %v500
          %v672 = vpop.f32.mrf.mxu0
          %v673 = vadd.f32 %v526, %v672
          %v674 = vpop.f32.mrf.mxu0
          %v675 = vadd.f32 %v526, %v674
          %676 = vmatmul.bf16.gmra.mxu0 %v501
          %v677 = vpop.f32.mrf.mxu0
          %v678 = vadd.f32 %v526, %v677
          %v679 = vpop.f32.mrf.mxu0
          %v680 = vadd.f32 %v526, %v679
          %681 = vmatmul.bf16.gmra.mxu0 %v502
          %v682 = vpop.f32.mrf.mxu0
          %v683 = vadd.f32 %v526, %v682
          %v684 = vpop.f32.mrf.mxu0
          %v685 = vadd.f32 %v526, %v684
          %686 = vmatmul.bf16.gmra.mxu0 %v503
          %v687 = vpop.f32.mrf.mxu0
          %v688 = vadd.f32 %v526, %v687
          %v689 = vpop.f32.mrf.mxu0
          %v690 = vadd.f32 %v526, %v689
          %691 = vmatmul.bf16.gmra.mxu0 %v504
          %v692 = vpop.f32.mrf.mxu0
          %v693 = vadd.f32 %v526, %v692
          %v694 = vpop.f32.mrf.mxu0
          %v695 = vadd.f32 %v526, %v694
          %696 = vmatmul.bf16.gmra.mxu0 %v505
          %v697 = vpop.f32.mrf.mxu0
          %v698 = vadd.f32 %v526, %v697
          %v699 = vpop.f32.mrf.mxu0
          %v700 = vadd.f32 %v526, %v699
          %701 = vmatmul.bf16.gmra.mxu0 %v506
          %v702 = vpop.f32.mrf.mxu0
          %v703 = vadd.f32 %v526, %v702
          %v704 = vpop.f32.mrf.mxu0
          %v705 = vadd.f32 %v526, %v704
          %706 = vdwg.mxu0
          %v707 = vpack.c.bf16 %v668, %v619
          %v708 = vpack.c.bf16 %v670, %v621
          %v709 = vpack.c.bf16 %v673, %v624
          %v710 = vpack.c.bf16 %v675, %v626
          %v711 = vpack.c.bf16 %v678, %v629
          %v712 = vpack.c.bf16 %v680, %v631
          %v713 = vpack.c.bf16 %v683, %v634
          %v714 = vpack.c.bf16 %v685, %v636
          %v715 = vpack.c.bf16 %v688, %v639
          %v716 = vpack.c.bf16 %v690, %v641
          %v717 = vpack.c.bf16 %v693, %v644
          %v718 = vpack.c.bf16 %v695, %v646
          %v719 = vpack.c.bf16 %v698, %v649
          %v720 = vpack.c.bf16 %v700, %v651
          %v721 = vpack.c.bf16 %v703, %v654
          %v722 = vpack.c.bf16 %v705, %v656
          %723 = vst [vmem:[#allocation2] sm:$0xff] %v707
          %724 = vst [vmem:[#allocation2 + $0x8] sm:$0xff] %v708
          %725 = vst [vmem:[#allocation2 + $0x10] sm:$0xff] %v709
          %726 = vst [vmem:[#allocation2 + $0x18] sm:$0xff] %v710
          %727 = vst [vmem:[#allocation2 + $0x20] sm:$0xff] %v711
          %728 = vst [vmem:[#allocation2 + $0x28] sm:$0xff] %v712
          %729 = vst [vmem:[#allocation2 + $0x30] sm:$0xff] %v713
          %730 = vst [vmem:[#allocation2 + $0x38] sm:$0xff] %v714
          %731 = vst [vmem:[#allocation2 + $0x40] sm:$0xff] %v715
          %732 = vst [vmem:[#allocation2 + $0x48] sm:$0xff] %v716
          %733 = vst [vmem:[#allocation2 + $0x50] sm:$0xff] %v717
          %734 = vst [vmem:[#allocation2 + $0x58] sm:$0xff] %v718
          %735 = vst [vmem:[#allocation2 + $0x60] sm:$0xff] %v719
          %736 = vst [vmem:[#allocation2 + $0x68] sm:$0xff] %v720
          %737 = vst [vmem:[#allocation2 + $0x70] sm:$0xff] %v721
          %738 = vst [vmem:[#allocation2 + $0x78] sm:$0xff] %v722
        $region76: #{tpu_custom_call.1} parent=51 // pred_fallthru
          _
        %v739 = vld [vmem:[%s404] sm:$0xff]
        %v740 = vld [vmem:[%s404 + $0x8] sm:$0xff]
        %v741 = vld [vmem:[%s404 + $0x10] sm:$0xff]
        %v742 = vld [vmem:[%s404 + $0x18] sm:$0xff]
        %v743 = vld [vmem:[%s404 + $0x20] sm:$0xff]
        %v744 = vld [vmem:[%s404 + $0x28] sm:$0xff]
        %v745 = vld [vmem:[%s404 + $0x30] sm:$0xff]
        %v746 = vld [vmem:[%s404 + $0x38] sm:$0xff]
        %v747 = vld [vmem:[%s404 + $0x40] sm:$0xff]
        %v748 = vld [vmem:[%s404 + $0x48] sm:$0xff]
        %v749 = vld [vmem:[%s404 + $0x50] sm:$0xff]
        %v750 = vld [vmem:[%s404 + $0x58] sm:$0xff]
        %v751 = vld [vmem:[%s404 + $0x60] sm:$0xff]
        %v752 = vld [vmem:[%s404 + $0x68] sm:$0xff]
        %v753 = vld [vmem:[%s404 + $0x70] sm:$0xff]
        %v754 = vld [vmem:[%s404 + $0x78] sm:$0xff]
        %v755 = vpack.c.bf16 %v740, %v739
        %v756 = vpack.c.bf16 %v742, %v741
        %v757 = vpack.c.bf16 %v744, %v743
        %v758 = vpack.c.bf16 %v746, %v745
        %v759 = vpack.c.bf16 %v748, %v747
        %v760 = vpack.c.bf16 %v750, %v749
        %v761 = vpack.c.bf16 %v752, %v751
        %v762 = vpack.c.bf16 %v754, %v753
        %v763 = vld [vmem:[#allocation8] sm:$0xf]
        %v764 = vld [vmem:[#allocation8 + $0x4] sm:$0xf]
        %v765 = vld [vmem:[#allocation8 + $0x8] sm:$0xf]
        %v766 = vld [vmem:[#allocation8 + $0xc] sm:$0xf]
        %v767 = vld [vmem:[#allocation8 + $0x10] sm:$0xf]
        %v768 = vld [vmem:[#allocation8 + $0x14] sm:$0xf]
        %v769 = vld [vmem:[#allocation8 + $0x18] sm:$0xf]
        %v770 = vld [vmem:[#allocation8 + $0x1c] sm:$0xf]
        %v771 = vld [vmem:[#allocation8 + $0x20] sm:$0xf]
        %v772 = vld [vmem:[#allocation8 + $0x24] sm:$0xf]
        %v773 = vld [vmem:[#allocation8 + $0x28] sm:$0xf]
        %v774 = vld [vmem:[#allocation8 + $0x2c] sm:$0xf]
        %v775 = vld [vmem:[#allocation8 + $0x30] sm:$0xf]
        %v776 = vld [vmem:[#allocation8 + $0x34] sm:$0xf]
        %v777 = vld [vmem:[#allocation8 + $0x38] sm:$0xf]
        %v778 = vld [vmem:[#allocation8 + $0x3c] sm:$0xf]
        %v779 = vld [vmem:[%s3] sm:$0x1]
        %v781 = vperm.slane %v779, 0
        %v799 = vunpack.c.l.b16 %v763
        %v800 = vunpack.c.l.b16 %v764
        %v801 = vunpack.c.l.b16 %v765
        %v802 = vunpack.c.l.b16 %v766
        %v803 = vunpack.c.l.b16 %v767
        %v804 = vunpack.c.l.b16 %v768
        %v805 = vunpack.c.l.b16 %v769
        %v806 = vunpack.c.l.b16 %v770
        %v807 = vunpack.c.l.b16 %v771
        %v808 = vunpack.c.l.b16 %v772
        %v809 = vunpack.c.l.b16 %v773
        %v810 = vunpack.c.l.b16 %v774
        %v811 = vunpack.c.l.b16 %v775
        %v812 = vunpack.c.l.b16 %v776
        %v813 = vunpack.c.l.b16 %v777
        %v814 = vunpack.c.l.b16 %v778
        %v815 = vpack.c.b16 %v800, %v799
        %v816 = vpack.c.b16 %v802, %v801
        %v817 = vpack.c.b16 %v804, %v803
        %v818 = vpack.c.b16 %v806, %v805
        %v819 = vpack.c.b16 %v808, %v807
        %v820 = vpack.c.b16 %v810, %v809
        %v821 = vpack.c.b16 %v812, %v811
        %v822 = vpack.c.b16 %v814, %v813
        %831 = vmatpush.bf16.msra.mxu0 %v822
        %832 = vmatpush.bf16.msra.mxu0 %v821
        %833 = vmatpush.bf16.msra.mxu0 %v820
        %834 = vmatpush.bf16.msra.mxu0 %v819
        %835 = vmatpush.bf16.msra.mxu0 %v818
        %836 = vmatpush.bf16.msra.mxu0 %v817
        %837 = vmatpush.bf16.msra.mxu0 %v816
        %838 = vmatpush.bf16.msra.mxu0 %v815
        %839 = vmatmul.bf16.gmra.mxu0 %v755
        %v840 = vpop.f32.mrf.mxu0
        %v841 = vadd.f32 %v781, %v840
        %v842 = vpop.f32.mrf.mxu0
        %v843 = vadd.f32 %v781, %v842
        %844 = vmatmul.bf16.gmra.mxu0 %v756
        %v845 = vpop.f32.mrf.mxu0
        %v846 = vadd.f32 %v781, %v845
        %v847 = vpop.f32.mrf.mxu0
        %v848 = vadd.f32 %v781, %v847
        %849 = vmatmul.bf16.gmra.mxu0 %v757
        %v850 = vpop.f32.mrf.mxu0
        %v851 = vadd.f32 %v781, %v850
        %v852 = vpop.f32.mrf.mxu0
        %v853 = vadd.f32 %v781, %v852
        %854 = vmatmul.bf16.gmra.mxu0 %v758
        %v855 = vpop.f32.mrf.mxu0
        %v856 = vadd.f32 %v781, %v855
        %v857 = vpop.f32.mrf.mxu0
        %v858 = vadd.f32 %v781, %v857
        %859 = vmatmul.bf16.gmra.mxu0 %v759
        %v860 = vpop.f32.mrf.mxu0
        %v861 = vadd.f32 %v781, %v860
        %v862 = vpop.f32.mrf.mxu0
        %v863 = vadd.f32 %v781, %v862
        %864 = vmatmul.bf16.gmra.mxu0 %v760
        %v865 = vpop.f32.mrf.mxu0
        %v866 = vadd.f32 %v781, %v865
        %v867 = vpop.f32.mrf.mxu0
        %v868 = vadd.f32 %v781, %v867
        %869 = vmatmul.bf16.gmra.mxu0 %v761
        %v870 = vpop.f32.mrf.mxu0
        %v871 = vadd.f32 %v781, %v870
        %v872 = vpop.f32.mrf.mxu0
        %v873 = vadd.f32 %v781, %v872
        %874 = vmatmul.bf16.gmra.mxu0 %v762
        %v875 = vpop.f32.mrf.mxu0
        %v876 = vadd.f32 %v781, %v875
        %v877 = vpop.f32.mrf.mxu0
        %v878 = vadd.f32 %v781, %v877
        %879 = vdwg.mxu0
        %v880 = vmul.f32 %v841, 0.17677669
        %v881 = vmul.f32 %v843, 0.17677669
        %v882 = vmul.f32 %v846, 0.17677669
        %v883 = vmul.f32 %v848, 0.17677669
        %v884 = vmul.f32 %v851, 0.17677669
        %v885 = vmul.f32 %v853, 0.17677669
        %v886 = vmul.f32 %v856, 0.17677669
        %v887 = vmul.f32 %v858, 0.17677669
        %v888 = vmul.f32 %v861, 0.17677669
        %v889 = vmul.f32 %v863, 0.17677669
        %v890 = vmul.f32 %v866, 0.17677669
        %v891 = vmul.f32 %v868, 0.17677669
        %v892 = vmul.f32 %v871, 0.17677669
        %v893 = vmul.f32 %v873, 0.17677669
        %v894 = vmul.f32 %v876, 0.17677669
        %v895 = vmul.f32 %v878, 0.17677669
        %v896 = vpack.c.bf16 %v880, %v880
        %v897 = vpack.c.bf16 %v881, %v881
        %v898 = vpack.c.bf16 %v882, %v882
        %v899 = vpack.c.bf16 %v883, %v883
        %v900 = vpack.c.bf16 %v884, %v884
        %v901 = vpack.c.bf16 %v885, %v885
        %v902 = vpack.c.bf16 %v886, %v886
        %v903 = vpack.c.bf16 %v887, %v887
        %v904 = vpack.c.bf16 %v888, %v888
        %v905 = vpack.c.bf16 %v889, %v889
        %v906 = vpack.c.bf16 %v890, %v890
        %v907 = vpack.c.bf16 %v891, %v891
        %v908 = vpack.c.bf16 %v892, %v892
        %v909 = vpack.c.bf16 %v893, %v893
        %v910 = vpack.c.bf16 %v894, %v894
        %v911 = vpack.c.bf16 %v895, %v895
        %v912 = vld [vmem:[#allocation2] sm:$0xff]
        %v913 = vld [vmem:[#allocation2 + $0x8] sm:$0xff]
        %v914 = vld [vmem:[#allocation2 + $0x10] sm:$0xff]
        %v915 = vld [vmem:[#allocation2 + $0x18] sm:$0xff]
        %v916 = vld [vmem:[#allocation2 + $0x20] sm:$0xff]
        %v917 = vld [vmem:[#allocation2 + $0x28] sm:$0xff]
        %v918 = vld [vmem:[#allocation2 + $0x30] sm:$0xff]
        %v919 = vld [vmem:[#allocation2 + $0x38] sm:$0xff]
        %v920 = vld [vmem:[#allocation2 + $0x40] sm:$0xff]
        %v921 = vld [vmem:[#allocation2 + $0x48] sm:$0xff]
        %v922 = vld [vmem:[#allocation2 + $0x50] sm:$0xff]
        %v923 = vld [vmem:[#allocation2 + $0x58] sm:$0xff]
        %v924 = vld [vmem:[#allocation2 + $0x60] sm:$0xff]
        %v925 = vld [vmem:[#allocation2 + $0x68] sm:$0xff]
        %v926 = vld [vmem:[#allocation2 + $0x70] sm:$0xff]
        %v927 = vld [vmem:[#allocation2 + $0x78] sm:$0xff]
        %v944 = vunpack.c.l.b16 %v896
        %v945 = vunpack.c.l.b16 %v897
        %v946 = vunpack.c.l.b16 %v898
        %v947 = vunpack.c.l.b16 %v899
        %v948 = vunpack.c.l.b16 %v900
        %v949 = vunpack.c.l.b16 %v901
        %v950 = vunpack.c.l.b16 %v902
        %v951 = vunpack.c.l.b16 %v903
        %v952 = vunpack.c.l.b16 %v904
        %v953 = vunpack.c.l.b16 %v905
        %v954 = vunpack.c.l.b16 %v906
        %v955 = vunpack.c.l.b16 %v907
        %v956 = vunpack.c.l.b16 %v908
        %v957 = vunpack.c.l.b16 %v909
        %v958 = vunpack.c.l.b16 %v910
        %v959 = vunpack.c.l.b16 %v911
        %v960 = vpack.c.b16 %v945, %v944
        %v961 = vpack.c.b16 %v947, %v946
        %v962 = vpack.c.b16 %v949, %v948
        %v963 = vpack.c.b16 %v951, %v950
        %v964 = vpack.c.b16 %v953, %v952
        %v965 = vpack.c.b16 %v955, %v954
        %v966 = vpack.c.b16 %v957, %v956
        %v967 = vpack.c.b16 %v959, %v958
        %v984 = vunpack.c.l.b16 %v912
        %v985 = vunpack.c.l.b16 %v913
        %v986 = vunpack.c.l.b16 %v914
        %v987 = vunpack.c.l.b16 %v915
        %v988 = vunpack.c.l.b16 %v916
        %v989 = vunpack.c.l.b16 %v917
        %v990 = vunpack.c.l.b16 %v918
        %v991 = vunpack.c.l.b16 %v919
        %v992 = vunpack.c.l.b16 %v920
        %v993 = vunpack.c.l.b16 %v921
        %v994 = vunpack.c.l.b16 %v922
        %v995 = vunpack.c.l.b16 %v923
        %v996 = vunpack.c.l.b16 %v924
        %v997 = vunpack.c.l.b16 %v925
        %v998 = vunpack.c.l.b16 %v926
        %v999 = vunpack.c.l.b16 %v927
        %v1000 = vpack.c.b16 %v985, %v984
        %v1001 = vpack.c.b16 %v987, %v986
        %v1002 = vpack.c.b16 %v989, %v988
        %v1003 = vpack.c.b16 %v991, %v990
        %v1004 = vpack.c.b16 %v993, %v992
        %v1005 = vpack.c.b16 %v995, %v994
        %v1006 = vpack.c.b16 %v997, %v996
        %v1007 = vpack.c.b16 %v999, %v998
        %vm1008 = vcmask 261120
        %v1010 = vsel %vm1008, %v960, 0
        %v1013 = vsel %vm1008, %v961, 0
        %v1016 = vsel %vm1008, %v962, 0
        %v1019 = vsel %vm1008, %v963, 0
        %v1022 = vsel %vm1008, %v964, 0
        %v1025 = vsel %vm1008, %v965, 0
        %v1028 = vsel %vm1008, %v966, 0
        %v1031 = vsel %vm1008, %v967, 0
        %v1034 = vsel %vm1008, %v1000, 0
        %v1037 = vsel %vm1008, %v1001, 0
        %v1040 = vsel %vm1008, %v1002, 0
        %v1043 = vsel %vm1008, %v1003, 0
        %v1046 = vsel %vm1008, %v1004, 0
        %v1049 = vsel %vm1008, %v1005, 0
        %v1052 = vsel %vm1008, %v1006, 0
        %v1055 = vsel %vm1008, %v1007, 0
        %1057 = vmatpush.bf16.xpose.msra.mxu0 %v1055
        %1058 = vmatpush.bf16.xpose.msra.mxu0 %v1052
        %1059 = vmatpush.bf16.xpose.msra.mxu0 %v1049
        %1060 = vmatpush.bf16.xpose.msra.mxu0 %v1046
        %1061 = vmatpush.bf16.xpose.msra.mxu0 %v1043
        %1062 = vmatpush.bf16.xpose.msra.mxu0 %v1040
        %1063 = vmatpush.bf16.xpose.msra.mxu0 %v1037
        %1064 = vmatpush.bf16.xpose.msra.mxu0 %v1034
        %1065 = vmatmul.bf16.gmra.mxu0 %v1010
        %v1066 = vpop.f32.mrf.mxu0
        %v1067 = vadd.f32 0.0, %v1066
        %v1068 = vpop.f32.mrf.mxu0
        %v1069 = vadd.f32 0.0, %v1068
        %1070 = vmatmul.bf16.gmra.mxu0 %v1013
        %v1071 = vpop.f32.mrf.mxu0
        %v1072 = vadd.f32 0.0, %v1071
        %v1073 = vpop.f32.mrf.mxu0
        %v1074 = vadd.f32 0.0, %v1073
        %1075 = vmatmul.bf16.gmra.mxu0 %v1016
        %v1076 = vpop.f32.mrf.mxu0
        %v1077 = vadd.f32 0.0, %v1076
        %v1078 = vpop.f32.mrf.mxu0
        %v1079 = vadd.f32 0.0, %v1078
        %1080 = vmatmul.bf16.gmra.mxu0 %v1019
        %v1081 = vpop.f32.mrf.mxu0
        %v1082 = vadd.f32 0.0, %v1081
        %v1083 = vpop.f32.mrf.mxu0
        %v1084 = vadd.f32 0.0, %v1083
        %1085 = vmatmul.bf16.gmra.mxu0 %v1022
        %v1086 = vpop.f32.mrf.mxu0
        %v1087 = vadd.f32 0.0, %v1086
        %v1088 = vpop.f32.mrf.mxu0
        %v1089 = vadd.f32 0.0, %v1088
        %1090 = vmatmul.bf16.gmra.mxu0 %v1025
        %v1091 = vpop.f32.mrf.mxu0
        %v1092 = vadd.f32 0.0, %v1091
        %v1093 = vpop.f32.mrf.mxu0
        %v1094 = vadd.f32 0.0, %v1093
        %1095 = vmatmul.bf16.gmra.mxu0 %v1028
        %v1096 = vpop.f32.mrf.mxu0
        %v1097 = vadd.f32 0.0, %v1096
        %v1098 = vpop.f32.mrf.mxu0
        %v1099 = vadd.f32 0.0, %v1098
        %1100 = vmatmul.bf16.gmra.mxu0 %v1031
        %v1101 = vpop.f32.mrf.mxu0
        %v1102 = vadd.f32 0.0, %v1101
        %v1103 = vpop.f32.mrf.mxu0
        %v1104 = vadd.f32 0.0, %v1103
        %1105 = vdwg.mxu0
        %1106 = vmax.xlane.f32.xlu0 %v1067
        %v1107 = vpop.xlane.xlu0 %1106
        %1108 = vmax.xlane.f32.xlu0 %v1069
        %v1109 = vpop.xlane.xlu0 %1108
        %1110 = vmax.xlane.f32.xlu0 %v1072
        %v1111 = vpop.xlane.xlu0 %1110
        %1112 = vmax.xlane.f32.xlu0 %v1074
        %v1113 = vpop.xlane.xlu0 %1112
        %1114 = vmax.xlane.f32.xlu0 %v1077
        %v1115 = vpop.xlane.xlu0 %1114
        %1116 = vmax.xlane.f32.xlu0 %v1079
        %v1117 = vpop.xlane.xlu0 %1116
        %1118 = vmax.xlane.f32.xlu0 %v1082
        %v1119 = vpop.xlane.xlu0 %1118
        %1120 = vmax.xlane.f32.xlu0 %v1084
        %v1121 = vpop.xlane.xlu0 %1120
        %1122 = vmax.xlane.f32.xlu0 %v1087
        %v1123 = vpop.xlane.xlu0 %1122
        %1124 = vmax.xlane.f32.xlu0 %v1089
        %v1125 = vpop.xlane.xlu0 %1124
        %1126 = vmax.xlane.f32.xlu0 %v1092
        %v1127 = vpop.xlane.xlu0 %1126
        %1128 = vmax.xlane.f32.xlu0 %v1094
        %v1129 = vpop.xlane.xlu0 %1128
        %1130 = vmax.xlane.f32.xlu0 %v1097
        %v1131 = vpop.xlane.xlu0 %1130
        %1132 = vmax.xlane.f32.xlu0 %v1099
        %v1133 = vpop.xlane.xlu0 %1132
        %1134 = vmax.xlane.f32.xlu0 %v1102
        %v1135 = vpop.xlane.xlu0 %1134
        %1136 = vmax.xlane.f32.xlu0 %v1104
        %v1137 = vpop.xlane.xlu0 %1136
        %v1138 = vsub.f32 %v1067, %v1107
        %v1139 = vsub.f32 %v1069, %v1109
        %v1140 = vsub.f32 %v1072, %v1111
        %v1141 = vsub.f32 %v1074, %v1113
        %v1142 = vsub.f32 %v1077, %v1115
        %v1143 = vsub.f32 %v1079, %v1117
        %v1144 = vsub.f32 %v1082, %v1119
        %v1145 = vsub.f32 %v1084, %v1121
        %v1146 = vsub.f32 %v1087, %v1123
        %v1147 = vsub.f32 %v1089, %v1125
        %v1148 = vsub.f32 %v1092, %v1127
        %v1149 = vsub.f32 %v1094, %v1129
        %v1150 = vsub.f32 %v1097, %v1131
        %v1151 = vsub.f32 %v1099, %v1133
        %v1152 = vsub.f32 %v1102, %v1135
        %v1153 = vsub.f32 %v1104, %v1137
        %v1154 = vmul.f32 %v1138, 1.442695
        %v1155 = vpow.pop %v1154
        %v1156 = vmul.f32 %v1139, 1.442695
        %v1157 = vpow.pop %v1156
        %v1158 = vmul.f32 %v1140, 1.442695
        %v1159 = vpow.pop %v1158
        %v1160 = vmul.f32 %v1141, 1.442695
        %v1161 = vpow.pop %v1160
        %v1162 = vmul.f32 %v1142, 1.442695
        %v1163 = vpow.pop %v1162
        %v1164 = vmul.f32 %v1143, 1.442695
        %v1165 = vpow.pop %v1164
        %v1166 = vmul.f32 %v1144, 1.442695
        %v1167 = vpow.pop %v1166
        %v1168 = vmul.f32 %v1145, 1.442695
        %v1169 = vpow.pop %v1168
        %v1170 = vmul.f32 %v1146, 1.442695
        %v1171 = vpow.pop %v1170
        %v1172 = vmul.f32 %v1147, 1.442695
        %v1173 = vpow.pop %v1172
        %v1174 = vmul.f32 %v1148, 1.442695
        %v1175 = vpow.pop %v1174
        %v1176 = vmul.f32 %v1149, 1.442695
        %v1177 = vpow.pop %v1176
        %v1178 = vmul.f32 %v1150, 1.442695
        %v1179 = vpow.pop %v1178
        %v1180 = vmul.f32 %v1151, 1.442695
        %v1181 = vpow.pop %v1180
        %v1182 = vmul.f32 %v1152, 1.442695
        %v1183 = vpow.pop %v1182
        %v1184 = vmul.f32 %v1153, 1.442695
        %v1185 = vpow.pop %v1184
        %1186 = vadd.xlane.f32.xlu0 %v1155
        %v1187 = vpop.xlane.xlu0 %1186
        %1188 = vadd.xlane.f32.xlu0 %v1157
        %v1189 = vpop.xlane.xlu0 %1188
        %1190 = vadd.xlane.f32.xlu0 %v1159
        %v1191 = vpop.xlane.xlu0 %1190
        %1192 = vadd.xlane.f32.xlu0 %v1161
        %v1193 = vpop.xlane.xlu0 %1192
        %1194 = vadd.xlane.f32.xlu0 %v1163
        %v1195 = vpop.xlane.xlu0 %1194
        %1196 = vadd.xlane.f32.xlu0 %v1165
        %v1197 = vpop.xlane.xlu0 %1196
        %1198 = vadd.xlane.f32.xlu0 %v1167
        %v1199 = vpop.xlane.xlu0 %1198
        %1200 = vadd.xlane.f32.xlu0 %v1169
        %v1201 = vpop.xlane.xlu0 %1200
        %1202 = vadd.xlane.f32.xlu0 %v1171
        %v1203 = vpop.xlane.xlu0 %1202
        %1204 = vadd.xlane.f32.xlu0 %v1173
        %v1205 = vpop.xlane.xlu0 %1204
        %1206 = vadd.xlane.f32.xlu0 %v1175
        %v1207 = vpop.xlane.xlu0 %1206
        %1208 = vadd.xlane.f32.xlu0 %v1177
        %v1209 = vpop.xlane.xlu0 %1208
        %1210 = vadd.xlane.f32.xlu0 %v1179
        %v1211 = vpop.xlane.xlu0 %1210
        %1212 = vadd.xlane.f32.xlu0 %v1181
        %v1213 = vpop.xlane.xlu0 %1212
        %1214 = vadd.xlane.f32.xlu0 %v1183
        %v1215 = vpop.xlane.xlu0 %1214
        %1216 = vadd.xlane.f32.xlu0 %v1185
        %v1217 = vpop.xlane.xlu0 %1216
        %v1218 = vrcp.pop %v1187
        %v1219 = vrcp.pop %v1189
        %v1220 = vrcp.pop %v1191
        %v1221 = vrcp.pop %v1193
        %v1222 = vrcp.pop %v1195
        %v1223 = vrcp.pop %v1197
        %v1224 = vrcp.pop %v1199
        %v1225 = vrcp.pop %v1201
        %v1226 = vrcp.pop %v1203
        %v1227 = vrcp.pop %v1205
        %v1228 = vrcp.pop %v1207
        %v1229 = vrcp.pop %v1209
        %v1230 = vrcp.pop %v1211
        %v1231 = vrcp.pop %v1213
        %v1232 = vrcp.pop %v1215
        %v1233 = vrcp.pop %v1217
        %v1234 = vmul.f32 %v1155, %v1218
        %v1235 = vmul.f32 %v1157, %v1219
        %v1236 = vmul.f32 %v1159, %v1220
        %v1237 = vmul.f32 %v1161, %v1221
        %v1238 = vmul.f32 %v1163, %v1222
        %v1239 = vmul.f32 %v1165, %v1223
        %v1240 = vmul.f32 %v1167, %v1224
        %v1241 = vmul.f32 %v1169, %v1225
        %v1242 = vmul.f32 %v1171, %v1226
        %v1243 = vmul.f32 %v1173, %v1227
        %v1244 = vmul.f32 %v1175, %v1228
        %v1245 = vmul.f32 %v1177, %v1229
        %v1246 = vmul.f32 %v1179, %v1230
        %v1247 = vmul.f32 %v1181, %v1231
        %v1248 = vmul.f32 %v1183, %v1232
        %v1249 = vmul.f32 %v1185, %v1233
        %1250 = vst [vmem:[%s474] sm:$0xff] %v1234
        %1251 = vst [vmem:[%s474 + $0x8] sm:$0xff] %v1235
        %1252 = vst [vmem:[%s474 + $0x10] sm:$0xff] %v1236
        %1253 = vst [vmem:[%s474 + $0x18] sm:$0xff] %v1237
        %1254 = vst [vmem:[%s474 + $0x20] sm:$0xff] %v1238
        %1255 = vst [vmem:[%s474 + $0x28] sm:$0xff] %v1239
        %1256 = vst [vmem:[%s474 + $0x30] sm:$0xff] %v1240
        %1257 = vst [vmem:[%s474 + $0x38] sm:$0xff] %v1241
        %1258 = vst [vmem:[%s474 + $0x40] sm:$0xff] %v1242
        %1259 = vst [vmem:[%s474 + $0x48] sm:$0xff] %v1243
        %1260 = vst [vmem:[%s474 + $0x50] sm:$0xff] %v1244
        %1261 = vst [vmem:[%s474 + $0x58] sm:$0xff] %v1245
        %1262 = vst [vmem:[%s474 + $0x60] sm:$0xff] %v1246
        %1263 = vst [vmem:[%s474 + $0x68] sm:$0xff] %v1247
        %1264 = vst [vmem:[%s474 + $0x70] sm:$0xff] %v1248
        %1265 = vst [vmem:[%s474 + $0x78] sm:$0xff] %v1249
        %v1266 = vpack.c.bf16 %v1235, %v1234
        %v1267 = vpack.c.bf16 %v1237, %v1236
        %v1268 = vpack.c.bf16 %v1239, %v1238
        %v1269 = vpack.c.bf16 %v1241, %v1240
        %v1270 = vpack.c.bf16 %v1243, %v1242
        %v1271 = vpack.c.bf16 %v1245, %v1244
        %v1272 = vpack.c.bf16 %v1247, %v1246
        %v1273 = vpack.c.bf16 %v1249, %v1248
        %v1274 = vunpack.c.h.b16 %v912
        %v1275 = vunpack.c.h.b16 %v913
        %v1276 = vunpack.c.h.b16 %v914
        %v1277 = vunpack.c.h.b16 %v915
        %v1278 = vunpack.c.h.b16 %v916
        %v1279 = vunpack.c.h.b16 %v917
        %v1280 = vunpack.c.h.b16 %v918
        %v1281 = vunpack.c.h.b16 %v919
        %v1282 = vunpack.c.h.b16 %v920
        %v1283 = vunpack.c.h.b16 %v921
        %v1284 = vunpack.c.h.b16 %v922
        %v1285 = vunpack.c.h.b16 %v923
        %v1286 = vunpack.c.h.b16 %v924
        %v1287 = vunpack.c.h.b16 %v925
        %v1288 = vunpack.c.h.b16 %v926
        %v1289 = vunpack.c.h.b16 %v927
        %v1290 = vpack.c.b16 %v1275, %v1274
        %v1291 = vpack.c.b16 %v1277, %v1276
        %v1292 = vpack.c.b16 %v1279, %v1278
        %v1293 = vpack.c.b16 %v1281, %v1280
        %v1294 = vpack.c.b16 %v1283, %v1282
        %v1295 = vpack.c.b16 %v1285, %v1284
        %v1296 = vpack.c.b16 %v1287, %v1286
        %v1297 = vpack.c.b16 %v1289, %v1288
        %1306 = vmatpush.bf16.msra.mxu0 %v1297
        %1307 = vmatpush.bf16.msra.mxu0 %v1296
        %1308 = vmatpush.bf16.msra.mxu0 %v1295
        %1309 = vmatpush.bf16.msra.mxu0 %v1294
        %1310 = vmatpush.bf16.msra.mxu0 %v1293
        %1311 = vmatpush.bf16.msra.mxu0 %v1292
        %1312 = vmatpush.bf16.msra.mxu0 %v1291
        %1313 = vmatpush.bf16.msra.mxu0 %v1290
        %1314 = vmatmul.bf16.gmra.mxu0 %v1266
        %v1315 = vpop.f32.mrf.mxu0
        %v1316 = vadd.f32 0.0, %v1315
        %v1317 = vpop.f32.mrf.mxu0
        %v1318 = vadd.f32 0.0, %v1317
        %1319 = vmatmul.bf16.gmra.mxu0 %v1267
        %v1320 = vpop.f32.mrf.mxu0
        %v1321 = vadd.f32 0.0, %v1320
        %v1322 = vpop.f32.mrf.mxu0
        %v1323 = vadd.f32 0.0, %v1322
        %1324 = vmatmul.bf16.gmra.mxu0 %v1268
        %v1325 = vpop.f32.mrf.mxu0
        %v1326 = vadd.f32 0.0, %v1325
        %v1327 = vpop.f32.mrf.mxu0
        %v1328 = vadd.f32 0.0, %v1327
        %1329 = vmatmul.bf16.gmra.mxu0 %v1269
        %v1330 = vpop.f32.mrf.mxu0
        %v1331 = vadd.f32 0.0, %v1330
        %v1332 = vpop.f32.mrf.mxu0
        %v1333 = vadd.f32 0.0, %v1332
        %1334 = vmatmul.bf16.gmra.mxu0 %v1270
        %v1335 = vpop.f32.mrf.mxu0
        %v1336 = vadd.f32 0.0, %v1335
        %v1337 = vpop.f32.mrf.mxu0
        %v1338 = vadd.f32 0.0, %v1337
        %1339 = vmatmul.bf16.gmra.mxu0 %v1271
        %v1340 = vpop.f32.mrf.mxu0
        %v1341 = vadd.f32 0.0, %v1340
        %v1342 = vpop.f32.mrf.mxu0
        %v1343 = vadd.f32 0.0, %v1342
        %1344 = vmatmul.bf16.gmra.mxu0 %v1272
        %v1345 = vpop.f32.mrf.mxu0
        %v1346 = vadd.f32 0.0, %v1345
        %v1347 = vpop.f32.mrf.mxu0
        %v1348 = vadd.f32 0.0, %v1347
        %1349 = vmatmul.bf16.gmra.mxu0 %v1273
        %v1350 = vpop.f32.mrf.mxu0
        %v1351 = vadd.f32 0.0, %v1350
        %v1352 = vpop.f32.mrf.mxu0
        %v1353 = vadd.f32 0.0, %v1352
        %1354 = vdwg.mxu0
        %v1355 = vpack.c.bf16 %v1318, %v1316
        %v1356 = vpack.c.bf16 %v1323, %v1321
        %v1357 = vpack.c.bf16 %v1328, %v1326
        %v1358 = vpack.c.bf16 %v1333, %v1331
        %v1359 = vpack.c.bf16 %v1338, %v1336
        %v1360 = vpack.c.bf16 %v1343, %v1341
        %v1361 = vpack.c.bf16 %v1348, %v1346
        %v1362 = vpack.c.bf16 %v1353, %v1351
        %v1363 = vld [vmem:[#allocation11] sm:$0xf]
        %v1364 = vld [vmem:[#allocation11 + $0x4] sm:$0xf]
        %v1365 = vld [vmem:[#allocation11 + $0x8] sm:$0xf]
        %v1366 = vld [vmem:[#allocation11 + $0xc] sm:$0xf]
        %1367 = vrot.lane.b32.xlu0 %v960, 96
        %v1368 = vpop.permute.xlu0 %1367
        %1369 = vrot.lane.b32.xlu0 %v961, 96
        %v1370 = vpop.permute.xlu0 %1369
        %1371 = vrot.lane.b32.xlu0 %v962, 96
        %v1372 = vpop.permute.xlu0 %1371
        %1373 = vrot.lane.b32.xlu0 %v963, 96
        %v1374 = vpop.permute.xlu0 %1373
        %1375 = vrot.lane.b32.xlu0 %v964, 96
        %v1376 = vpop.permute.xlu0 %1375
        %1377 = vrot.lane.b32.xlu0 %v965, 96
        %v1378 = vpop.permute.xlu0 %1377
        %1379 = vrot.lane.b32.xlu0 %v966, 96
        %v1380 = vpop.permute.xlu0 %1379
        %1381 = vrot.lane.b32.xlu0 %v967, 96
        %v1382 = vpop.permute.xlu0 %1381
        %1383 = vrot.lane.b32.xlu0 %v1000, 96
        %v1384 = vpop.permute.xlu0 %1383
        %1385 = vrot.lane.b32.xlu0 %v1001, 96
        %v1386 = vpop.permute.xlu0 %1385
        %1387 = vrot.lane.b32.xlu0 %v1002, 96
        %v1388 = vpop.permute.xlu0 %1387
        %1389 = vrot.lane.b32.xlu0 %v1003, 96
        %v1390 = vpop.permute.xlu0 %1389
        %1391 = vrot.lane.b32.xlu0 %v1004, 96
        %v1392 = vpop.permute.xlu0 %1391
        %1393 = vrot.lane.b32.xlu0 %v1005, 96
        %v1394 = vpop.permute.xlu0 %1393
        %1395 = vrot.lane.b32.xlu0 %v1006, 96
        %v1396 = vpop.permute.xlu0 %1395
        %1397 = vrot.lane.b32.xlu0 %v1007, 96
        %v1398 = vpop.permute.xlu0 %1397
        %v1400 = vsel %vm1008, %v1368, 0
        %v1403 = vsel %vm1008, %v1370, 0
        %v1406 = vsel %vm1008, %v1372, 0
        %v1409 = vsel %vm1008, %v1374, 0
        %v1412 = vsel %vm1008, %v1376, 0
        %v1415 = vsel %vm1008, %v1378, 0
        %v1418 = vsel %vm1008, %v1380, 0
        %v1421 = vsel %vm1008, %v1382, 0
        %v1424 = vsel %vm1008, %v1384, 0
        %v1427 = vsel %vm1008, %v1386, 0
        %v1430 = vsel %vm1008, %v1388, 0
        %v1433 = vsel %vm1008, %v1390, 0
        %v1436 = vsel %vm1008, %v1392, 0
        %v1439 = vsel %vm1008, %v1394, 0
        %v1442 = vsel %vm1008, %v1396, 0
        %v1445 = vsel %vm1008, %v1398, 0
        %1447 = vmatpush.bf16.xpose.msra.mxu0 %v1445
        %1448 = vmatpush.bf16.xpose.msra.mxu0 %v1442
        %1449 = vmatpush.bf16.xpose.msra.mxu0 %v1439
        %1450 = vmatpush.bf16.xpose.msra.mxu0 %v1436
        %1451 = vmatpush.bf16.xpose.msra.mxu0 %v1433
        %1452 = vmatpush.bf16.xpose.msra.mxu0 %v1430
        %1453 = vmatpush.bf16.xpose.msra.mxu0 %v1427
        %1454 = vmatpush.bf16.xpose.msra.mxu0 %v1424
        %1455 = vmatmul.bf16.gmra.mxu0 %v1400
        %v1456 = vpop.f32.mrf.mxu0
        %v1457 = vadd.f32 0.0, %v1456
        %v1458 = vpop.f32.mrf.mxu0
        %v1459 = vadd.f32 0.0, %v1458
        %1460 = vmatmul.bf16.gmra.mxu0 %v1403
        %v1461 = vpop.f32.mrf.mxu0
        %v1462 = vadd.f32 0.0, %v1461
        %v1463 = vpop.f32.mrf.mxu0
        %v1464 = vadd.f32 0.0, %v1463
        %1465 = vmatmul.bf16.gmra.mxu0 %v1406
        %v1466 = vpop.f32.mrf.mxu0
        %v1467 = vadd.f32 0.0, %v1466
        %v1468 = vpop.f32.mrf.mxu0
        %v1469 = vadd.f32 0.0, %v1468
        %1470 = vmatmul.bf16.gmra.mxu0 %v1409
        %v1471 = vpop.f32.mrf.mxu0
        %v1472 = vadd.f32 0.0, %v1471
        %v1473 = vpop.f32.mrf.mxu0
        %v1474 = vadd.f32 0.0, %v1473
        %1475 = vmatmul.bf16.gmra.mxu0 %v1412
        %v1476 = vpop.f32.mrf.mxu0
        %v1477 = vadd.f32 0.0, %v1476
        %v1478 = vpop.f32.mrf.mxu0
        %v1479 = vadd.f32 0.0, %v1478
        %1480 = vmatmul.bf16.gmra.mxu0 %v1415
        %v1481 = vpop.f32.mrf.mxu0
        %v1482 = vadd.f32 0.0, %v1481
        %v1483 = vpop.f32.mrf.mxu0
        %v1484 = vadd.f32 0.0, %v1483
        %1485 = vmatmul.bf16.gmra.mxu0 %v1418
        %v1486 = vpop.f32.mrf.mxu0
        %v1487 = vadd.f32 0.0, %v1486
        %v1488 = vpop.f32.mrf.mxu0
        %v1489 = vadd.f32 0.0, %v1488
        %1490 = vmatmul.bf16.gmra.mxu0 %v1421
        %v1491 = vpop.f32.mrf.mxu0
        %v1492 = vadd.f32 0.0, %v1491
        %v1493 = vpop.f32.mrf.mxu0
        %v1494 = vadd.f32 0.0, %v1493
        %1495 = vdwg.mxu0
        %1496 = vmax.xlane.f32.xlu0 %v1457
        %v1497 = vpop.xlane.xlu0 %1496
        %1498 = vmax.xlane.f32.xlu0 %v1459
        %v1499 = vpop.xlane.xlu0 %1498
        %1500 = vmax.xlane.f32.xlu0 %v1462
        %v1501 = vpop.xlane.xlu0 %1500
        %1502 = vmax.xlane.f32.xlu0 %v1464
        %v1503 = vpop.xlane.xlu0 %1502
        %1504 = vmax.xlane.f32.xlu0 %v1467
        %v1505 = vpop.xlane.xlu0 %1504
        %1506 = vmax.xlane.f32.xlu0 %v1469
        %v1507 = vpop.xlane.xlu0 %1506
        %1508 = vmax.xlane.f32.xlu0 %v1472
        %v1509 = vpop.xlane.xlu0 %1508
        %1510 = vmax.xlane.f32.xlu0 %v1474
        %v1511 = vpop.xlane.xlu0 %1510
        %1512 = vmax.xlane.f32.xlu0 %v1477
        %v1513 = vpop.xlane.xlu0 %1512
        %1514 = vmax.xlane.f32.xlu0 %v1479
        %v1515 = vpop.xlane.xlu0 %1514
        %1516 = vmax.xlane.f32.xlu0 %v1482
        %v1517 = vpop.xlane.xlu0 %1516
        %1518 = vmax.xlane.f32.xlu0 %v1484
        %v1519 = vpop.xlane.xlu0 %1518
        %1520 = vmax.xlane.f32.xlu0 %v1487
        %v1521 = vpop.xlane.xlu0 %1520
        %1522 = vmax.xlane.f32.xlu0 %v1489
        %v1523 = vpop.xlane.xlu0 %1522
        %1524 = vmax.xlane.f32.xlu0 %v1492
        %v1525 = vpop.xlane.xlu0 %1524
        %1526 = vmax.xlane.f32.xlu0 %v1494
        %v1527 = vpop.xlane.xlu0 %1526
        %v1528 = vsub.f32 %v1457, %v1497
        %v1529 = vsub.f32 %v1459, %v1499
        %v1530 = vsub.f32 %v1462, %v1501
        %v1531 = vsub.f32 %v1464, %v1503
        %v1532 = vsub.f32 %v1467, %v1505
        %v1533 = vsub.f32 %v1469, %v1507
        %v1534 = vsub.f32 %v1472, %v1509
        %v1535 = vsub.f32 %v1474, %v1511
        %v1536 = vsub.f32 %v1477, %v1513
        %v1537 = vsub.f32 %v1479, %v1515
        %v1538 = vsub.f32 %v1482, %v1517
        %v1539 = vsub.f32 %v1484, %v1519
        %v1540 = vsub.f32 %v1487, %v1521
        %v1541 = vsub.f32 %v1489, %v1523
        %v1542 = vsub.f32 %v1492, %v1525
        %v1543 = vsub.f32 %v1494, %v1527
        %v1544 = vmul.f32 %v1528, 1.442695
        %v1545 = vpow.pop %v1544
        %v1546 = vmul.f32 %v1529, 1.442695
        %v1547 = vpow.pop %v1546
        %v1548 = vmul.f32 %v1530, 1.442695
        %v1549 = vpow.pop %v1548
        %v1550 = vmul.f32 %v1531, 1.442695
        %v1551 = vpow.pop %v1550
        %v1552 = vmul.f32 %v1532, 1.442695
        %v1553 = vpow.pop %v1552
        %v1554 = vmul.f32 %v1533, 1.442695
        %v1555 = vpow.pop %v1554
        %v1556 = vmul.f32 %v1534, 1.442695
        %v1557 = vpow.pop %v1556
        %v1558 = vmul.f32 %v1535, 1.442695
        %v1559 = vpow.pop %v1558
        %v1560 = vmul.f32 %v1536, 1.442695
        %v1561 = vpow.pop %v1560
        %v1562 = vmul.f32 %v1537, 1.442695
        %v1563 = vpow.pop %v1562
        %v1564 = vmul.f32 %v1538, 1.442695
        %v1565 = vpow.pop %v1564
        %v1566 = vmul.f32 %v1539, 1.442695
        %v1567 = vpow.pop %v1566
        %v1568 = vmul.f32 %v1540, 1.442695
        %v1569 = vpow.pop %v1568
        %v1570 = vmul.f32 %v1541, 1.442695
        %v1571 = vpow.pop %v1570
        %v1572 = vmul.f32 %v1542, 1.442695
        %v1573 = vpow.pop %v1572
        %v1574 = vmul.f32 %v1543, 1.442695
        %v1575 = vpow.pop %v1574
        %1576 = vadd.xlane.f32.xlu0 %v1545
        %v1577 = vpop.xlane.xlu0 %1576
        %1578 = vadd.xlane.f32.xlu0 %v1547
        %v1579 = vpop.xlane.xlu0 %1578
        %1580 = vadd.xlane.f32.xlu0 %v1549
        %v1581 = vpop.xlane.xlu0 %1580
        %1582 = vadd.xlane.f32.xlu0 %v1551
        %v1583 = vpop.xlane.xlu0 %1582
        %1584 = vadd.xlane.f32.xlu0 %v1553
        %v1585 = vpop.xlane.xlu0 %1584
        %1586 = vadd.xlane.f32.xlu0 %v1555
        %v1587 = vpop.xlane.xlu0 %1586
        %1588 = vadd.xlane.f32.xlu0 %v1557
        %v1589 = vpop.xlane.xlu0 %1588
        %1590 = vadd.xlane.f32.xlu0 %v1559
        %v1591 = vpop.xlane.xlu0 %1590
        %1592 = vadd.xlane.f32.xlu0 %v1561
        %v1593 = vpop.xlane.xlu0 %1592
        %1594 = vadd.xlane.f32.xlu0 %v1563
        %v1595 = vpop.xlane.xlu0 %1594
        %1596 = vadd.xlane.f32.xlu0 %v1565
        %v1597 = vpop.xlane.xlu0 %1596
        %1598 = vadd.xlane.f32.xlu0 %v1567
        %v1599 = vpop.xlane.xlu0 %1598
        %1600 = vadd.xlane.f32.xlu0 %v1569
        %v1601 = vpop.xlane.xlu0 %1600
        %1602 = vadd.xlane.f32.xlu0 %v1571
        %v1603 = vpop.xlane.xlu0 %1602
        %1604 = vadd.xlane.f32.xlu0 %v1573
        %v1605 = vpop.xlane.xlu0 %1604
        %1606 = vadd.xlane.f32.xlu0 %v1575
        %v1607 = vpop.xlane.xlu0 %1606
        %v1608 = vrcp.pop %v1577
        %v1609 = vrcp.pop %v1579
        %v1610 = vrcp.pop %v1581
        %v1611 = vrcp.pop %v1583
        %v1612 = vrcp.pop %v1585
        %v1613 = vrcp.pop %v1587
        %v1614 = vrcp.pop %v1589
        %v1615 = vrcp.pop %v1591
        %v1616 = vrcp.pop %v1593
        %v1617 = vrcp.pop %v1595
        %v1618 = vrcp.pop %v1597
        %v1619 = vrcp.pop %v1599
        %v1620 = vrcp.pop %v1601
        %v1621 = vrcp.pop %v1603
        %v1622 = vrcp.pop %v1605
        %v1623 = vrcp.pop %v1607
        %v1624 = vmul.f32 %v1545, %v1608
        %v1625 = vmul.f32 %v1547, %v1609
        %v1626 = vmul.f32 %v1549, %v1610
        %v1627 = vmul.f32 %v1551, %v1611
        %v1628 = vmul.f32 %v1553, %v1612
        %v1629 = vmul.f32 %v1555, %v1613
        %v1630 = vmul.f32 %v1557, %v1614
        %v1631 = vmul.f32 %v1559, %v1615
        %v1632 = vmul.f32 %v1561, %v1616
        %v1633 = vmul.f32 %v1563, %v1617
        %v1634 = vmul.f32 %v1565, %v1618
        %v1635 = vmul.f32 %v1567, %v1619
        %v1636 = vmul.f32 %v1569, %v1620
        %v1637 = vmul.f32 %v1571, %v1621
        %v1638 = vmul.f32 %v1573, %v1622
        %v1639 = vmul.f32 %v1575, %v1623
        %s1640 = scalar_lea.vmem %s474, 128 [#allocation13]
        %1641 = vst [vmem:[%s1640] sm:$0xff] %v1624
        %1642 = vst [vmem:[%s1640 + $0x8] sm:$0xff] %v1625
        %1643 = vst [vmem:[%s1640 + $0x10] sm:$0xff] %v1626
        %1644 = vst [vmem:[%s1640 + $0x18] sm:$0xff] %v1627
        %1645 = vst [vmem:[%s1640 + $0x20] sm:$0xff] %v1628
        %1646 = vst [vmem:[%s1640 + $0x28] sm:$0xff] %v1629
        %1647 = vst [vmem:[%s1640 + $0x30] sm:$0xff] %v1630
        %1648 = vst [vmem:[%s1640 + $0x38] sm:$0xff] %v1631
        %1649 = vst [vmem:[%s1640 + $0x40] sm:$0xff] %v1632
        %1650 = vst [vmem:[%s1640 + $0x48] sm:$0xff] %v1633
        %1651 = vst [vmem:[%s1640 + $0x50] sm:$0xff] %v1634
        %1652 = vst [vmem:[%s1640 + $0x58] sm:$0xff] %v1635
        %1653 = vst [vmem:[%s1640 + $0x60] sm:$0xff] %v1636
        %1654 = vst [vmem:[%s1640 + $0x68] sm:$0xff] %v1637
        %1655 = vst [vmem:[%s1640 + $0x70] sm:$0xff] %v1638
        %1656 = vst [vmem:[%s1640 + $0x78] sm:$0xff] %v1639
        %v1657 = vpack.c.bf16 %v1625, %v1624
        %v1658 = vpack.c.bf16 %v1627, %v1626
        %v1659 = vpack.c.bf16 %v1629, %v1628
        %v1660 = vpack.c.bf16 %v1631, %v1630
        %v1661 = vpack.c.bf16 %v1633, %v1632
        %v1662 = vpack.c.bf16 %v1635, %v1634
        %v1663 = vpack.c.bf16 %v1637, %v1636
        %v1664 = vpack.c.bf16 %v1639, %v1638
        %1665 = vrot.lane.b32.xlu0 %v1290, 96
        %v1666 = vpop.permute.xlu0 %1665
        %1667 = vrot.lane.b32.xlu0 %v1291, 96
        %v1668 = vpop.permute.xlu0 %1667
        %1669 = vrot.lane.b32.xlu0 %v1292, 96
        %v1670 = vpop.permute.xlu0 %1669
        %1671 = vrot.lane.b32.xlu0 %v1293, 96
        %v1672 = vpop.permute.xlu0 %1671
        %1673 = vrot.lane.b32.xlu0 %v1294, 96
        %v1674 = vpop.permute.xlu0 %1673
        %1675 = vrot.lane.b32.xlu0 %v1295, 96
        %v1676 = vpop.permute.xlu0 %1675
        %1677 = vrot.lane.b32.xlu0 %v1296, 96
        %v1678 = vpop.permute.xlu0 %1677
        %1679 = vrot.lane.b32.xlu0 %v1297, 96
        %v1680 = vpop.permute.xlu0 %1679
        %1689 = vmatpush.bf16.msra.mxu0 %v1680
        %1690 = vmatpush.bf16.msra.mxu0 %v1678
        %1691 = vmatpush.bf16.msra.mxu0 %v1676
        %1692 = vmatpush.bf16.msra.mxu0 %v1674
        %1693 = vmatpush.bf16.msra.mxu0 %v1672
        %1694 = vmatpush.bf16.msra.mxu0 %v1670
        %1695 = vmatpush.bf16.msra.mxu0 %v1668
        %1696 = vmatpush.bf16.msra.mxu0 %v1666
        %1697 = vmatmul.bf16.gmra.mxu0 %v1657
        %v1698 = vpop.f32.mrf.mxu0
        %v1699 = vadd.f32 0.0, %v1698
        %v1700 = vpop.f32.mrf.mxu0
        %v1701 = vadd.f32 0.0, %v1700
        %1702 = vmatmul.bf16.gmra.mxu0 %v1658
        %v1703 = vpop.f32.mrf.mxu0
        %v1704 = vadd.f32 0.0, %v1703
        %v1705 = vpop.f32.mrf.mxu0
        %v1706 = vadd.f32 0.0, %v1705
        %1707 = vmatmul.bf16.gmra.mxu0 %v1659
        %v1708 = vpop.f32.mrf.mxu0
        %v1709 = vadd.f32 0.0, %v1708
        %v1710 = vpop.f32.mrf.mxu0
        %v1711 = vadd.f32 0.0, %v1710
        %1712 = vmatmul.bf16.gmra.mxu0 %v1660
        %v1713 = vpop.f32.mrf.mxu0
        %v1714 = vadd.f32 0.0, %v1713
        %v1715 = vpop.f32.mrf.mxu0
        %v1716 = vadd.f32 0.0, %v1715
        %1717 = vmatmul.bf16.gmra.mxu0 %v1661
        %v1718 = vpop.f32.mrf.mxu0
        %v1719 = vadd.f32 0.0, %v1718
        %v1720 = vpop.f32.mrf.mxu0
        %v1721 = vadd.f32 0.0, %v1720
        %1722 = vmatmul.bf16.gmra.mxu0 %v1662
        %v1723 = vpop.f32.mrf.mxu0
        %v1724 = vadd.f32 0.0, %v1723
        %v1725 = vpop.f32.mrf.mxu0
        %v1726 = vadd.f32 0.0, %v1725
        %1727 = vmatmul.bf16.gmra.mxu0 %v1663
        %v1728 = vpop.f32.mrf.mxu0
        %v1729 = vadd.f32 0.0, %v1728
        %v1730 = vpop.f32.mrf.mxu0
        %v1731 = vadd.f32 0.0, %v1730
        %1732 = vmatmul.bf16.gmra.mxu0 %v1664
        %v1733 = vpop.f32.mrf.mxu0
        %v1734 = vadd.f32 0.0, %v1733
        %v1735 = vpop.f32.mrf.mxu0
        %v1736 = vadd.f32 0.0, %v1735
        %1737 = vdwg.mxu0
        %v1738 = vpack.c.bf16 %v1701, %v1699
        %v1739 = vpack.c.bf16 %v1706, %v1704
        %v1740 = vpack.c.bf16 %v1711, %v1709
        %v1741 = vpack.c.bf16 %v1716, %v1714
        %v1742 = vpack.c.bf16 %v1721, %v1719
        %v1743 = vpack.c.bf16 %v1726, %v1724
        %v1744 = vpack.c.bf16 %v1731, %v1729
        %v1745 = vpack.c.bf16 %v1736, %v1734
        %v1746 = vld [vmem:[#allocation11 + $0x10] sm:$0xf]
        %v1747 = vld [vmem:[#allocation11 + $0x14] sm:$0xf]
        %v1748 = vld [vmem:[#allocation11 + $0x18] sm:$0xf]
        %v1749 = vld [vmem:[#allocation11 + $0x1c] sm:$0xf]
        %v1754 = vunpack.c.l.b16 %v1746
        %v1755 = vunpack.c.l.b16 %v1747
        %v1756 = vunpack.c.l.b16 %v1748
        %v1757 = vunpack.c.l.b16 %v1749
        %v1758 = vpack.c.b16 %v1755, %v1754
        %v1759 = vpack.c.b16 %v1757, %v1756
        %v1763 = vsel %vm1008, %v1738, 0
        %v1766 = vsel %vm1008, %v1739, 0
        %v1769 = vsel %vm1008, %v1740, 0
        %v1772 = vsel %vm1008, %v1741, 0
        %v1775 = vsel %vm1008, %v1742, 0
        %v1778 = vsel %vm1008, %v1743, 0
        %v1781 = vsel %vm1008, %v1744, 0
        %v1784 = vsel %vm1008, %v1745, 0
        %1786 = vmatpush.bf16.msra.mxu0 0
        %1787 = vmatpush.bf16.msra.mxu0 0
        %1788 = vmatpush.bf16.msra.mxu0 0
        %1789 = vmatpush.bf16.msra.mxu0 0
        %1790 = vmatpush.bf16.msra.mxu0 0
        %1791 = vmatpush.bf16.msra.mxu0 0
        %1792 = vmatpush.bf16.msra.mxu0 %v1759
        %1793 = vmatpush.bf16.msra.mxu0 %v1758
        %1794 = vmatmul.bf16.gmra.mxu0 %v1763
        %v1795 = vpop.f32.mrf.mxu0
        %v1796 = vadd.f32 0.0, %v1795
        %v1797 = vpop.f32.mrf.mxu0
        %v1798 = vadd.f32 0.0, %v1797
        %1799 = vmatmul.bf16.gmra.mxu0 %v1766
        %v1800 = vpop.f32.mrf.mxu0
        %v1801 = vadd.f32 0.0, %v1800
        %v1802 = vpop.f32.mrf.mxu0
        %v1803 = vadd.f32 0.0, %v1802
        %1804 = vmatmul.bf16.gmra.mxu0 %v1769
        %v1805 = vpop.f32.mrf.mxu0
        %v1806 = vadd.f32 0.0, %v1805
        %v1807 = vpop.f32.mrf.mxu0
        %v1808 = vadd.f32 0.0, %v1807
        %1809 = vmatmul.bf16.gmra.mxu0 %v1772
        %v1810 = vpop.f32.mrf.mxu0
        %v1811 = vadd.f32 0.0, %v1810
        %v1812 = vpop.f32.mrf.mxu0
        %v1813 = vadd.f32 0.0, %v1812
        %1814 = vmatmul.bf16.gmra.mxu0 %v1775
        %v1815 = vpop.f32.mrf.mxu0
        %v1816 = vadd.f32 0.0, %v1815
        %v1817 = vpop.f32.mrf.mxu0
        %v1818 = vadd.f32 0.0, %v1817
        %1819 = vmatmul.bf16.gmra.mxu0 %v1778
        %v1820 = vpop.f32.mrf.mxu0
        %v1821 = vadd.f32 0.0, %v1820
        %v1822 = vpop.f32.mrf.mxu0
        %v1823 = vadd.f32 0.0, %v1822
        %1824 = vmatmul.bf16.gmra.mxu0 %v1781
        %v1825 = vpop.f32.mrf.mxu0
        %v1826 = vadd.f32 0.0, %v1825
        %v1827 = vpop.f32.mrf.mxu0
        %v1828 = vadd.f32 0.0, %v1827
        %1829 = vmatmul.bf16.gmra.mxu0 %v1784
        %v1830 = vpop.f32.mrf.mxu0
        %v1831 = vadd.f32 0.0, %v1830
        %v1832 = vpop.f32.mrf.mxu0
        %v1833 = vadd.f32 0.0, %v1832
        %1834 = vdwg.mxu0
        %v1839 = vunpack.c.l.b16 %v1363
        %v1840 = vunpack.c.l.b16 %v1364
        %v1841 = vunpack.c.l.b16 %v1365
        %v1842 = vunpack.c.l.b16 %v1366
        %v1843 = vpack.c.b16 %v1840, %v1839
        %v1844 = vpack.c.b16 %v1842, %v1841
        %v1848 = vsel %vm1008, %v1355, 0
        %v1851 = vsel %vm1008, %v1356, 0
        %v1854 = vsel %vm1008, %v1357, 0
        %v1857 = vsel %vm1008, %v1358, 0
        %v1860 = vsel %vm1008, %v1359, 0
        %v1863 = vsel %vm1008, %v1360, 0
        %v1866 = vsel %vm1008, %v1361, 0
        %v1869 = vsel %vm1008, %v1362, 0
        %1871 = vmatpush.bf16.msra.mxu0 0
        %1872 = vmatpush.bf16.msra.mxu0 0
        %1873 = vmatpush.bf16.msra.mxu0 0
        %1874 = vmatpush.bf16.msra.mxu0 0
        %1875 = vmatpush.bf16.msra.mxu0 0
        %1876 = vmatpush.bf16.msra.mxu0 0
        %1877 = vmatpush.bf16.msra.mxu0 %v1844
        %1878 = vmatpush.bf16.msra.mxu0 %v1843
        %1879 = vmatmul.bf16.gmra.mxu0 %v1848
        %v1880 = vpop.f32.mrf.mxu0
        %v1881 = vadd.f32 %v1796, %v1880
        %v1882 = vpop.f32.mrf.mxu0
        %v1883 = vadd.f32 %v1798, %v1882
        %1884 = vmatmul.bf16.gmra.mxu0 %v1851
        %v1885 = vpop.f32.mrf.mxu0
        %v1886 = vadd.f32 %v1801, %v1885
        %v1887 = vpop.f32.mrf.mxu0
        %v1888 = vadd.f32 %v1803, %v1887
        %1889 = vmatmul.bf16.gmra.mxu0 %v1854
        %v1890 = vpop.f32.mrf.mxu0
        %v1891 = vadd.f32 %v1806, %v1890
        %v1892 = vpop.f32.mrf.mxu0
        %v1893 = vadd.f32 %v1808, %v1892
        %1894 = vmatmul.bf16.gmra.mxu0 %v1857
        %v1895 = vpop.f32.mrf.mxu0
        %v1896 = vadd.f32 %v1811, %v1895
        %v1897 = vpop.f32.mrf.mxu0
        %v1898 = vadd.f32 %v1813, %v1897
        %1899 = vmatmul.bf16.gmra.mxu0 %v1860
        %v1900 = vpop.f32.mrf.mxu0
        %v1901 = vadd.f32 %v1816, %v1900
        %v1902 = vpop.f32.mrf.mxu0
        %v1903 = vadd.f32 %v1818, %v1902
        %1904 = vmatmul.bf16.gmra.mxu0 %v1863
        %v1905 = vpop.f32.mrf.mxu0
        %v1906 = vadd.f32 %v1821, %v1905
        %v1907 = vpop.f32.mrf.mxu0
        %v1908 = vadd.f32 %v1823, %v1907
        %1909 = vmatmul.bf16.gmra.mxu0 %v1866
        %v1910 = vpop.f32.mrf.mxu0
        %v1911 = vadd.f32 %v1826, %v1910
        %v1912 = vpop.f32.mrf.mxu0
        %v1913 = vadd.f32 %v1828, %v1912
        %1914 = vmatmul.bf16.gmra.mxu0 %v1869
        %v1915 = vpop.f32.mrf.mxu0
        %v1916 = vadd.f32 %v1831, %v1915
        %v1917 = vpop.f32.mrf.mxu0
        %v1918 = vadd.f32 %v1833, %v1917
        %1919 = vdwg.mxu0
        %1920 = vrot.lane.b32.xlu0 %v960, 64
        %v1921 = vpop.permute.xlu0 %1920
        %1922 = vrot.lane.b32.xlu0 %v961, 64
        %v1923 = vpop.permute.xlu0 %1922
        %1924 = vrot.lane.b32.xlu0 %v962, 64
        %v1925 = vpop.permute.xlu0 %1924
        %1926 = vrot.lane.b32.xlu0 %v963, 64
        %v1927 = vpop.permute.xlu0 %1926
        %1928 = vrot.lane.b32.xlu0 %v964, 64
        %v1929 = vpop.permute.xlu0 %1928
        %1930 = vrot.lane.b32.xlu0 %v965, 64
        %v1931 = vpop.permute.xlu0 %1930
        %1932 = vrot.lane.b32.xlu0 %v966, 64
        %v1933 = vpop.permute.xlu0 %1932
        %1934 = vrot.lane.b32.xlu0 %v967, 64
        %v1935 = vpop.permute.xlu0 %1934
        %1936 = vrot.lane.b32.xlu0 %v1000, 64
        %v1937 = vpop.permute.xlu0 %1936
        %1938 = vrot.lane.b32.xlu0 %v1001, 64
        %v1939 = vpop.permute.xlu0 %1938
        %1940 = vrot.lane.b32.xlu0 %v1002, 64
        %v1941 = vpop.permute.xlu0 %1940
        %1942 = vrot.lane.b32.xlu0 %v1003, 64
        %v1943 = vpop.permute.xlu0 %1942
        %1944 = vrot.lane.b32.xlu0 %v1004, 64
        %v1945 = vpop.permute.xlu0 %1944
        %1946 = vrot.lane.b32.xlu0 %v1005, 64
        %v1947 = vpop.permute.xlu0 %1946
        %1948 = vrot.lane.b32.xlu0 %v1006, 64
        %v1949 = vpop.permute.xlu0 %1948
        %1950 = vrot.lane.b32.xlu0 %v1007, 64
        %v1951 = vpop.permute.xlu0 %1950
        %v1953 = vsel %vm1008, %v1921, 0
        %v1956 = vsel %vm1008, %v1923, 0
        %v1959 = vsel %vm1008, %v1925, 0
        %v1962 = vsel %vm1008, %v1927, 0
        %v1965 = vsel %vm1008, %v1929, 0
        %v1968 = vsel %vm1008, %v1931, 0
        %v1971 = vsel %vm1008, %v1933, 0
        %v1974 = vsel %vm1008, %v1935, 0
        %v1977 = vsel %vm1008, %v1937, 0
        %v1980 = vsel %vm1008, %v1939, 0
        %v1983 = vsel %vm1008, %v1941, 0
        %v1986 = vsel %vm1008, %v1943, 0
        %v1989 = vsel %vm1008, %v1945, 0
        %v1992 = vsel %vm1008, %v1947, 0
        %v1995 = vsel %vm1008, %v1949, 0
        %v1998 = vsel %vm1008, %v1951, 0
        %2000 = vmatpush.bf16.xpose.msra.mxu0 %v1998
        %2001 = vmatpush.bf16.xpose.msra.mxu0 %v1995
        %2002 = vmatpush.bf16.xpose.msra.mxu0 %v1992
        %2003 = vmatpush.bf16.xpose.msra.mxu0 %v1989
        %2004 = vmatpush.bf16.xpose.msra.mxu0 %v1986
        %2005 = vmatpush.bf16.xpose.msra.mxu0 %v1983
        %2006 = vmatpush.bf16.xpose.msra.mxu0 %v1980
        %2007 = vmatpush.bf16.xpose.msra.mxu0 %v1977
        %2008 = vmatmul.bf16.gmra.mxu0 %v1953
        %v2009 = vpop.f32.mrf.mxu0
        %v2010 = vadd.f32 0.0, %v2009
        %v2011 = vpop.f32.mrf.mxu0
        %v2012 = vadd.f32 0.0, %v2011
        %2013 = vmatmul.bf16.gmra.mxu0 %v1956
        %v2014 = vpop.f32.mrf.mxu0
        %v2015 = vadd.f32 0.0, %v2014
        %v2016 = vpop.f32.mrf.mxu0
        %v2017 = vadd.f32 0.0, %v2016
        %2018 = vmatmul.bf16.gmra.mxu0 %v1959
        %v2019 = vpop.f32.mrf.mxu0
        %v2020 = vadd.f32 0.0, %v2019
        %v2021 = vpop.f32.mrf.mxu0
        %v2022 = vadd.f32 0.0, %v2021
        %2023 = vmatmul.bf16.gmra.mxu0 %v1962
        %v2024 = vpop.f32.mrf.mxu0
        %v2025 = vadd.f32 0.0, %v2024
        %v2026 = vpop.f32.mrf.mxu0
        %v2027 = vadd.f32 0.0, %v2026
        %2028 = vmatmul.bf16.gmra.mxu0 %v1965
        %v2029 = vpop.f32.mrf.mxu0
        %v2030 = vadd.f32 0.0, %v2029
        %v2031 = vpop.f32.mrf.mxu0
        %v2032 = vadd.f32 0.0, %v2031
        %2033 = vmatmul.bf16.gmra.mxu0 %v1968
        %v2034 = vpop.f32.mrf.mxu0
        %v2035 = vadd.f32 0.0, %v2034
        %v2036 = vpop.f32.mrf.mxu0
        %v2037 = vadd.f32 0.0, %v2036
        %2038 = vmatmul.bf16.gmra.mxu0 %v1971
        %v2039 = vpop.f32.mrf.mxu0
        %v2040 = vadd.f32 0.0, %v2039
        %v2041 = vpop.f32.mrf.mxu0
        %v2042 = vadd.f32 0.0, %v2041
        %2043 = vmatmul.bf16.gmra.mxu0 %v1974
        %v2044 = vpop.f32.mrf.mxu0
        %v2045 = vadd.f32 0.0, %v2044
        %v2046 = vpop.f32.mrf.mxu0
        %v2047 = vadd.f32 0.0, %v2046
        %2048 = vdwg.mxu0
        %2049 = vmax.xlane.f32.xlu0 %v2010
        %v2050 = vpop.xlane.xlu0 %2049
        %2051 = vmax.xlane.f32.xlu0 %v2012
        %v2052 = vpop.xlane.xlu0 %2051
        %2053 = vmax.xlane.f32.xlu0 %v2015
        %v2054 = vpop.xlane.xlu0 %2053
        %2055 = vmax.xlane.f32.xlu0 %v2017
        %v2056 = vpop.xlane.xlu0 %2055
        %2057 = vmax.xlane.f32.xlu0 %v2020
        %v2058 = vpop.xlane.xlu0 %2057
        %2059 = vmax.xlane.f32.xlu0 %v2022
        %v2060 = vpop.xlane.xlu0 %2059
        %2061 = vmax.xlane.f32.xlu0 %v2025
        %v2062 = vpop.xlane.xlu0 %2061
        %2063 = vmax.xlane.f32.xlu0 %v2027
        %v2064 = vpop.xlane.xlu0 %2063
        %2065 = vmax.xlane.f32.xlu0 %v2030
        %v2066 = vpop.xlane.xlu0 %2065
        %2067 = vmax.xlane.f32.xlu0 %v2032
        %v2068 = vpop.xlane.xlu0 %2067
        %2069 = vmax.xlane.f32.xlu0 %v2035
        %v2070 = vpop.xlane.xlu0 %2069
        %2071 = vmax.xlane.f32.xlu0 %v2037
        %v2072 = vpop.xlane.xlu0 %2071
        %2073 = vmax.xlane.f32.xlu0 %v2040
        %v2074 = vpop.xlane.xlu0 %2073
        %2075 = vmax.xlane.f32.xlu0 %v2042
        %v2076 = vpop.xlane.xlu0 %2075
        %2077 = vmax.xlane.f32.xlu0 %v2045
        %v2078 = vpop.xlane.xlu0 %2077
        %2079 = vmax.xlane.f32.xlu0 %v2047
        %v2080 = vpop.xlane.xlu0 %2079
        %v2081 = vsub.f32 %v2010, %v2050
        %v2082 = vsub.f32 %v2012, %v2052
        %v2083 = vsub.f32 %v2015, %v2054
        %v2084 = vsub.f32 %v2017, %v2056
        %v2085 = vsub.f32 %v2020, %v2058
        %v2086 = vsub.f32 %v2022, %v2060
        %v2087 = vsub.f32 %v2025, %v2062
        %v2088 = vsub.f32 %v2027, %v2064
        %v2089 = vsub.f32 %v2030, %v2066
        %v2090 = vsub.f32 %v2032, %v2068
        %v2091 = vsub.f32 %v2035, %v2070
        %v2092 = vsub.f32 %v2037, %v2072
        %v2093 = vsub.f32 %v2040, %v2074
        %v2094 = vsub.f32 %v2042, %v2076
        %v2095 = vsub.f32 %v2045, %v2078
        %v2096 = vsub.f32 %v2047, %v2080
        %v2097 = vmul.f32 %v2081, 1.442695
        %v2098 = vpow.pop %v2097
        %v2099 = vmul.f32 %v2082, 1.442695
        %v2100 = vpow.pop %v2099
        %v2101 = vmul.f32 %v2083, 1.442695
        %v2102 = vpow.pop %v2101
        %v2103 = vmul.f32 %v2084, 1.442695
        %v2104 = vpow.pop %v2103
        %v2105 = vmul.f32 %v2085, 1.442695
        %v2106 = vpow.pop %v2105
        %v2107 = vmul.f32 %v2086, 1.442695
        %v2108 = vpow.pop %v2107
        %v2109 = vmul.f32 %v2087, 1.442695
        %v2110 = vpow.pop %v2109
        %v2111 = vmul.f32 %v2088, 1.442695
        %v2112 = vpow.pop %v2111
        %v2113 = vmul.f32 %v2089, 1.442695
        %v2114 = vpow.pop %v2113
        %v2115 = vmul.f32 %v2090, 1.442695
        %v2116 = vpow.pop %v2115
        %v2117 = vmul.f32 %v2091, 1.442695
        %v2118 = vpow.pop %v2117
        %v2119 = vmul.f32 %v2092, 1.442695
        %v2120 = vpow.pop %v2119
        %v2121 = vmul.f32 %v2093, 1.442695
        %v2122 = vpow.pop %v2121
        %v2123 = vmul.f32 %v2094, 1.442695
        %v2124 = vpow.pop %v2123
        %v2125 = vmul.f32 %v2095, 1.442695
        %v2126 = vpow.pop %v2125
        %v2127 = vmul.f32 %v2096, 1.442695
        %v2128 = vpow.pop %v2127
        %2129 = vadd.xlane.f32.xlu0 %v2098
        %v2130 = vpop.xlane.xlu0 %2129
        %2131 = vadd.xlane.f32.xlu0 %v2100
        %v2132 = vpop.xlane.xlu0 %2131
        %2133 = vadd.xlane.f32.xlu0 %v2102
        %v2134 = vpop.xlane.xlu0 %2133
        %2135 = vadd.xlane.f32.xlu0 %v2104
        %v2136 = vpop.xlane.xlu0 %2135
        %2137 = vadd.xlane.f32.xlu0 %v2106
        %v2138 = vpop.xlane.xlu0 %2137
        %2139 = vadd.xlane.f32.xlu0 %v2108
        %v2140 = vpop.xlane.xlu0 %2139
        %2141 = vadd.xlane.f32.xlu0 %v2110
        %v2142 = vpop.xlane.xlu0 %2141
        %2143 = vadd.xlane.f32.xlu0 %v2112
        %v2144 = vpop.xlane.xlu0 %2143
        %2145 = vadd.xlane.f32.xlu0 %v2114
        %v2146 = vpop.xlane.xlu0 %2145
        %2147 = vadd.xlane.f32.xlu0 %v2116
        %v2148 = vpop.xlane.xlu0 %2147
        %2149 = vadd.xlane.f32.xlu0 %v2118
        %v2150 = vpop.xlane.xlu0 %2149
        %2151 = vadd.xlane.f32.xlu0 %v2120
        %v2152 = vpop.xlane.xlu0 %2151
        %2153 = vadd.xlane.f32.xlu0 %v2122
        %v2154 = vpop.xlane.xlu0 %2153
        %2155 = vadd.xlane.f32.xlu0 %v2124
        %v2156 = vpop.xlane.xlu0 %2155
        %2157 = vadd.xlane.f32.xlu0 %v2126
        %v2158 = vpop.xlane.xlu0 %2157
        %2159 = vadd.xlane.f32.xlu0 %v2128
        %v2160 = vpop.xlane.xlu0 %2159
        %v2161 = vrcp.pop %v2130
        %v2162 = vrcp.pop %v2132
        %v2163 = vrcp.pop %v2134
        %v2164 = vrcp.pop %v2136
        %v2165 = vrcp.pop %v2138
        %v2166 = vrcp.pop %v2140
        %v2167 = vrcp.pop %v2142
        %v2168 = vrcp.pop %v2144
        %v2169 = vrcp.pop %v2146
        %v2170 = vrcp.pop %v2148
        %v2171 = vrcp.pop %v2150
        %v2172 = vrcp.pop %v2152
        %v2173 = vrcp.pop %v2154
        %v2174 = vrcp.pop %v2156
        %v2175 = vrcp.pop %v2158
        %v2176 = vrcp.pop %v2160
        %v2177 = vmul.f32 %v2098, %v2161
        %v2178 = vmul.f32 %v2100, %v2162
        %v2179 = vmul.f32 %v2102, %v2163
        %v2180 = vmul.f32 %v2104, %v2164
        %v2181 = vmul.f32 %v2106, %v2165
        %v2182 = vmul.f32 %v2108, %v2166
        %v2183 = vmul.f32 %v2110, %v2167
        %v2184 = vmul.f32 %v2112, %v2168
        %v2185 = vmul.f32 %v2114, %v2169
        %v2186 = vmul.f32 %v2116, %v2170
        %v2187 = vmul.f32 %v2118, %v2171
        %v2188 = vmul.f32 %v2120, %v2172
        %v2189 = vmul.f32 %v2122, %v2173
        %v2190 = vmul.f32 %v2124, %v2174
        %v2191 = vmul.f32 %v2126, %v2175
        %v2192 = vmul.f32 %v2128, %v2176
        %s2193 = scalar_lea.vmem %s474, 256 [#allocation13]
        %2194 = vst [vmem:[%s2193] sm:$0xff] %v2177
        %2195 = vst [vmem:[%s2193 + $0x8] sm:$0xff] %v2178
        %2196 = vst [vmem:[%s2193 + $0x10] sm:$0xff] %v2179
        %2197 = vst [vmem:[%s2193 + $0x18] sm:$0xff] %v2180
        %2198 = vst [vmem:[%s2193 + $0x20] sm:$0xff] %v2181
        %2199 = vst [vmem:[%s2193 + $0x28] sm:$0xff] %v2182
        %2200 = vst [vmem:[%s2193 + $0x30] sm:$0xff] %v2183
        %2201 = vst [vmem:[%s2193 + $0x38] sm:$0xff] %v2184
        %2202 = vst [vmem:[%s2193 + $0x40] sm:$0xff] %v2185
        %2203 = vst [vmem:[%s2193 + $0x48] sm:$0xff] %v2186
        %2204 = vst [vmem:[%s2193 + $0x50] sm:$0xff] %v2187
        %2205 = vst [vmem:[%s2193 + $0x58] sm:$0xff] %v2188
        %2206 = vst [vmem:[%s2193 + $0x60] sm:$0xff] %v2189
        %2207 = vst [vmem:[%s2193 + $0x68] sm:$0xff] %v2190
        %2208 = vst [vmem:[%s2193 + $0x70] sm:$0xff] %v2191
        %2209 = vst [vmem:[%s2193 + $0x78] sm:$0xff] %v2192
        %v2210 = vpack.c.bf16 %v2178, %v2177
        %v2211 = vpack.c.bf16 %v2180, %v2179
        %v2212 = vpack.c.bf16 %v2182, %v2181
        %v2213 = vpack.c.bf16 %v2184, %v2183
        %v2214 = vpack.c.bf16 %v2186, %v2185
        %v2215 = vpack.c.bf16 %v2188, %v2187
        %v2216 = vpack.c.bf16 %v2190, %v2189
        %v2217 = vpack.c.bf16 %v2192, %v2191
        %2218 = vrot.lane.b32.xlu0 %v1290, 64
        %v2219 = vpop.permute.xlu0 %2218
        %2220 = vrot.lane.b32.xlu0 %v1291, 64
        %v2221 = vpop.permute.xlu0 %2220
        %2222 = vrot.lane.b32.xlu0 %v1292, 64
        %v2223 = vpop.permute.xlu0 %2222
        %2224 = vrot.lane.b32.xlu0 %v1293, 64
        %v2225 = vpop.permute.xlu0 %2224
        %2226 = vrot.lane.b32.xlu0 %v1294, 64
        %v2227 = vpop.permute.xlu0 %2226
        %2228 = vrot.lane.b32.xlu0 %v1295, 64
        %v2229 = vpop.permute.xlu0 %2228
        %2230 = vrot.lane.b32.xlu0 %v1296, 64
        %v2231 = vpop.permute.xlu0 %2230
        %2232 = vrot.lane.b32.xlu0 %v1297, 64
        %v2233 = vpop.permute.xlu0 %2232
        %2242 = vmatpush.bf16.msra.mxu0 %v2233
        %2243 = vmatpush.bf16.msra.mxu0 %v2231
        %2244 = vmatpush.bf16.msra.mxu0 %v2229
        %2245 = vmatpush.bf16.msra.mxu0 %v2227
        %2246 = vmatpush.bf16.msra.mxu0 %v2225
        %2247 = vmatpush.bf16.msra.mxu0 %v2223
        %2248 = vmatpush.bf16.msra.mxu0 %v2221
        %2249 = vmatpush.bf16.msra.mxu0 %v2219
        %2250 = vmatmul.bf16.gmra.mxu0 %v2210
        %v2251 = vpop.f32.mrf.mxu0
        %v2252 = vadd.f32 0.0, %v2251
        %v2253 = vpop.f32.mrf.mxu0
        %v2254 = vadd.f32 0.0, %v2253
        %2255 = vmatmul.bf16.gmra.mxu0 %v2211
        %v2256 = vpop.f32.mrf.mxu0
        %v2257 = vadd.f32 0.0, %v2256
        %v2258 = vpop.f32.mrf.mxu0
        %v2259 = vadd.f32 0.0, %v2258
        %2260 = vmatmul.bf16.gmra.mxu0 %v2212
        %v2261 = vpop.f32.mrf.mxu0
        %v2262 = vadd.f32 0.0, %v2261
        %v2263 = vpop.f32.mrf.mxu0
        %v2264 = vadd.f32 0.0, %v2263
        %2265 = vmatmul.bf16.gmra.mxu0 %v2213
        %v2266 = vpop.f32.mrf.mxu0
        %v2267 = vadd.f32 0.0, %v2266
        %v2268 = vpop.f32.mrf.mxu0
        %v2269 = vadd.f32 0.0, %v2268
        %2270 = vmatmul.bf16.gmra.mxu0 %v2214
        %v2271 = vpop.f32.mrf.mxu0
        %v2272 = vadd.f32 0.0, %v2271
        %v2273 = vpop.f32.mrf.mxu0
        %v2274 = vadd.f32 0.0, %v2273
        %2275 = vmatmul.bf16.gmra.mxu0 %v2215
        %v2276 = vpop.f32.mrf.mxu0
        %v2277 = vadd.f32 0.0, %v2276
        %v2278 = vpop.f32.mrf.mxu0
        %v2279 = vadd.f32 0.0, %v2278
        %2280 = vmatmul.bf16.gmra.mxu0 %v2216
        %v2281 = vpop.f32.mrf.mxu0
        %v2282 = vadd.f32 0.0, %v2281
        %v2283 = vpop.f32.mrf.mxu0
        %v2284 = vadd.f32 0.0, %v2283
        %2285 = vmatmul.bf16.gmra.mxu0 %v2217
        %v2286 = vpop.f32.mrf.mxu0
        %v2287 = vadd.f32 0.0, %v2286
        %v2288 = vpop.f32.mrf.mxu0
        %v2289 = vadd.f32 0.0, %v2288
        %2290 = vdwg.mxu0
        %v2291 = vpack.c.bf16 %v2254, %v2252
        %v2292 = vpack.c.bf16 %v2259, %v2257
        %v2293 = vpack.c.bf16 %v2264, %v2262
        %v2294 = vpack.c.bf16 %v2269, %v2267
        %v2295 = vpack.c.bf16 %v2274, %v2272
        %v2296 = vpack.c.bf16 %v2279, %v2277
        %v2297 = vpack.c.bf16 %v2284, %v2282
        %v2298 = vpack.c.bf16 %v2289, %v2287
        %v2299 = vld [vmem:[#allocation11 + $0x20] sm:$0xf]
        %v2300 = vld [vmem:[#allocation11 + $0x24] sm:$0xf]
        %v2301 = vld [vmem:[#allocation11 + $0x28] sm:$0xf]
        %v2302 = vld [vmem:[#allocation11 + $0x2c] sm:$0xf]
        %v2307 = vunpack.c.l.b16 %v2299
        %v2308 = vunpack.c.l.b16 %v2300
        %v2309 = vunpack.c.l.b16 %v2301
        %v2310 = vunpack.c.l.b16 %v2302
        %v2311 = vpack.c.b16 %v2308, %v2307
        %v2312 = vpack.c.b16 %v2310, %v2309
        %v2316 = vsel %vm1008, %v2291, 0
        %v2319 = vsel %vm1008, %v2292, 0
        %v2322 = vsel %vm1008, %v2293, 0
        %v2325 = vsel %vm1008, %v2294, 0
        %v2328 = vsel %vm1008, %v2295, 0
        %v2331 = vsel %vm1008, %v2296, 0
        %v2334 = vsel %vm1008, %v2297, 0
        %v2337 = vsel %vm1008, %v2298, 0
        %2339 = vmatpush.bf16.msra.mxu0 0
        %2340 = vmatpush.bf16.msra.mxu0 0
        %2341 = vmatpush.bf16.msra.mxu0 0
        %2342 = vmatpush.bf16.msra.mxu0 0
        %2343 = vmatpush.bf16.msra.mxu0 0
        %2344 = vmatpush.bf16.msra.mxu0 0
        %2345 = vmatpush.bf16.msra.mxu0 %v2312
        %2346 = vmatpush.bf16.msra.mxu0 %v2311
        %2347 = vmatmul.bf16.gmra.mxu0 %v2316
        %v2348 = vpop.f32.mrf.mxu0
        %v2349 = vadd.f32 0.0, %v2348
        %v2350 = vpop.f32.mrf.mxu0
        %v2351 = vadd.f32 0.0, %v2350
        %2352 = vmatmul.bf16.gmra.mxu0 %v2319
        %v2353 = vpop.f32.mrf.mxu0
        %v2354 = vadd.f32 0.0, %v2353
        %v2355 = vpop.f32.mrf.mxu0
        %v2356 = vadd.f32 0.0, %v2355
        %2357 = vmatmul.bf16.gmra.mxu0 %v2322
        %v2358 = vpop.f32.mrf.mxu0
        %v2359 = vadd.f32 0.0, %v2358
        %v2360 = vpop.f32.mrf.mxu0
        %v2361 = vadd.f32 0.0, %v2360
        %2362 = vmatmul.bf16.gmra.mxu0 %v2325
        %v2363 = vpop.f32.mrf.mxu0
        %v2364 = vadd.f32 0.0, %v2363
        %v2365 = vpop.f32.mrf.mxu0
        %v2366 = vadd.f32 0.0, %v2365
        %2367 = vmatmul.bf16.gmra.mxu0 %v2328
        %v2368 = vpop.f32.mrf.mxu0
        %v2369 = vadd.f32 0.0, %v2368
        %v2370 = vpop.f32.mrf.mxu0
        %v2371 = vadd.f32 0.0, %v2370
        %2372 = vmatmul.bf16.gmra.mxu0 %v2331
        %v2373 = vpop.f32.mrf.mxu0
        %v2374 = vadd.f32 0.0, %v2373
        %v2375 = vpop.f32.mrf.mxu0
        %v2376 = vadd.f32 0.0, %v2375
        %2377 = vmatmul.bf16.gmra.mxu0 %v2334
        %v2378 = vpop.f32.mrf.mxu0
        %v2379 = vadd.f32 0.0, %v2378
        %v2380 = vpop.f32.mrf.mxu0
        %v2381 = vadd.f32 0.0, %v2380
        %2382 = vmatmul.bf16.gmra.mxu0 %v2337
        %v2383 = vpop.f32.mrf.mxu0
        %v2384 = vadd.f32 0.0, %v2383
        %v2385 = vpop.f32.mrf.mxu0
        %v2386 = vadd.f32 0.0, %v2385
        %2387 = vdwg.mxu0
        %v2388 = vadd.f32 %v1881, %v2349
        %v2389 = vadd.f32 %v1883, %v2351
        %v2390 = vadd.f32 %v1886, %v2354
        %v2391 = vadd.f32 %v1888, %v2356
        %v2392 = vadd.f32 %v1891, %v2359
        %v2393 = vadd.f32 %v1893, %v2361
        %v2394 = vadd.f32 %v1896, %v2364
        %v2395 = vadd.f32 %v1898, %v2366
        %v2396 = vadd.f32 %v1901, %v2369
        %v2397 = vadd.f32 %v1903, %v2371
        %v2398 = vadd.f32 %v1906, %v2374
        %v2399 = vadd.f32 %v1908, %v2376
        %v2400 = vadd.f32 %v1911, %v2379
        %v2401 = vadd.f32 %v1913, %v2381
        %v2402 = vadd.f32 %v1916, %v2384
        %v2403 = vadd.f32 %v1918, %v2386
        %2404 = vrot.lane.b32.xlu0 %v960, 32
        %v2405 = vpop.permute.xlu0 %2404
        %2406 = vrot.lane.b32.xlu0 %v961, 32
        %v2407 = vpop.permute.xlu0 %2406
        %2408 = vrot.lane.b32.xlu0 %v962, 32
        %v2409 = vpop.permute.xlu0 %2408
        %2410 = vrot.lane.b32.xlu0 %v963, 32
        %v2411 = vpop.permute.xlu0 %2410
        %2412 = vrot.lane.b32.xlu0 %v964, 32
        %v2413 = vpop.permute.xlu0 %2412
        %2414 = vrot.lane.b32.xlu0 %v965, 32
        %v2415 = vpop.permute.xlu0 %2414
        %2416 = vrot.lane.b32.xlu0 %v966, 32
        %v2417 = vpop.permute.xlu0 %2416
        %2418 = vrot.lane.b32.xlu0 %v967, 32
        %v2419 = vpop.permute.xlu0 %2418
        %2420 = vrot.lane.b32.xlu0 %v1000, 32
        %v2421 = vpop.permute.xlu0 %2420
        %2422 = vrot.lane.b32.xlu0 %v1001, 32
        %v2423 = vpop.permute.xlu0 %2422
        %2424 = vrot.lane.b32.xlu0 %v1002, 32
        %v2425 = vpop.permute.xlu0 %2424
        %2426 = vrot.lane.b32.xlu0 %v1003, 32
        %v2427 = vpop.permute.xlu0 %2426
        %2428 = vrot.lane.b32.xlu0 %v1004, 32
        %v2429 = vpop.permute.xlu0 %2428
        %2430 = vrot.lane.b32.xlu0 %v1005, 32
        %v2431 = vpop.permute.xlu0 %2430
        %2432 = vrot.lane.b32.xlu0 %v1006, 32
        %v2433 = vpop.permute.xlu0 %2432
        %2434 = vrot.lane.b32.xlu0 %v1007, 32
        %v2435 = vpop.permute.xlu0 %2434
        %v2437 = vsel %vm1008, %v2405, 0
        %v2440 = vsel %vm1008, %v2407, 0
        %v2443 = vsel %vm1008, %v2409, 0
        %v2446 = vsel %vm1008, %v2411, 0
        %v2449 = vsel %vm1008, %v2413, 0
        %v2452 = vsel %vm1008, %v2415, 0
        %v2455 = vsel %vm1008, %v2417, 0
        %v2458 = vsel %vm1008, %v2419, 0
        %v2461 = vsel %vm1008, %v2421, 0
        %v2464 = vsel %vm1008, %v2423, 0
        %v2467 = vsel %vm1008, %v2425, 0
        %v2470 = vsel %vm1008, %v2427, 0
        %v2473 = vsel %vm1008, %v2429, 0
        %v2476 = vsel %vm1008, %v2431, 0
        %v2479 = vsel %vm1008, %v2433, 0
        %v2482 = vsel %vm1008, %v2435, 0
        %2484 = vmatpush.bf16.xpose.msra.mxu0 %v2482
        %2485 = vmatpush.bf16.xpose.msra.mxu0 %v2479
        %2486 = vmatpush.bf16.xpose.msra.mxu0 %v2476
        %2487 = vmatpush.bf16.xpose.msra.mxu0 %v2473
        %2488 = vmatpush.bf16.xpose.msra.mxu0 %v2470
        %2489 = vmatpush.bf16.xpose.msra.mxu0 %v2467
        %2490 = vmatpush.bf16.xpose.msra.mxu0 %v2464
        %2491 = vmatpush.bf16.xpose.msra.mxu0 %v2461
        %2492 = vmatmul.bf16.gmra.mxu0 %v2437
        %v2493 = vpop.f32.mrf.mxu0
        %v2494 = vadd.f32 0.0, %v2493
        %v2495 = vpop.f32.mrf.mxu0
        %v2496 = vadd.f32 0.0, %v2495
        %2497 = vmatmul.bf16.gmra.mxu0 %v2440
        %v2498 = vpop.f32.mrf.mxu0
        %v2499 = vadd.f32 0.0, %v2498
        %v2500 = vpop.f32.mrf.mxu0
        %v2501 = vadd.f32 0.0, %v2500
        %2502 = vmatmul.bf16.gmra.mxu0 %v2443
        %v2503 = vpop.f32.mrf.mxu0
        %v2504 = vadd.f32 0.0, %v2503
        %v2505 = vpop.f32.mrf.mxu0
        %v2506 = vadd.f32 0.0, %v2505
        %2507 = vmatmul.bf16.gmra.mxu0 %v2446
        %v2508 = vpop.f32.mrf.mxu0
        %v2509 = vadd.f32 0.0, %v2508
        %v2510 = vpop.f32.mrf.mxu0
        %v2511 = vadd.f32 0.0, %v2510
        %2512 = vmatmul.bf16.gmra.mxu0 %v2449
        %v2513 = vpop.f32.mrf.mxu0
        %v2514 = vadd.f32 0.0, %v2513
        %v2515 = vpop.f32.mrf.mxu0
        %v2516 = vadd.f32 0.0, %v2515
        %2517 = vmatmul.bf16.gmra.mxu0 %v2452
        %v2518 = vpop.f32.mrf.mxu0
        %v2519 = vadd.f32 0.0, %v2518
        %v2520 = vpop.f32.mrf.mxu0
        %v2521 = vadd.f32 0.0, %v2520
        %2522 = vmatmul.bf16.gmra.mxu0 %v2455
        %v2523 = vpop.f32.mrf.mxu0
        %v2524 = vadd.f32 0.0, %v2523
        %v2525 = vpop.f32.mrf.mxu0
        %v2526 = vadd.f32 0.0, %v2525
        %2527 = vmatmul.bf16.gmra.mxu0 %v2458
        %v2528 = vpop.f32.mrf.mxu0
        %v2529 = vadd.f32 0.0, %v2528
        %v2530 = vpop.f32.mrf.mxu0
        %v2531 = vadd.f32 0.0, %v2530
        %2532 = vdwg.mxu0
        %2533 = vmax.xlane.f32.xlu0 %v2494
        %v2534 = vpop.xlane.xlu0 %2533
        %2535 = vmax.xlane.f32.xlu0 %v2496
        %v2536 = vpop.xlane.xlu0 %2535
        %2537 = vmax.xlane.f32.xlu0 %v2499
        %v2538 = vpop.xlane.xlu0 %2537
        %2539 = vmax.xlane.f32.xlu0 %v2501
        %v2540 = vpop.xlane.xlu0 %2539
        %2541 = vmax.xlane.f32.xlu0 %v2504
        %v2542 = vpop.xlane.xlu0 %2541
        %2543 = vmax.xlane.f32.xlu0 %v2506
        %v2544 = vpop.xlane.xlu0 %2543
        %2545 = vmax.xlane.f32.xlu0 %v2509
        %v2546 = vpop.xlane.xlu0 %2545
        %2547 = vmax.xlane.f32.xlu0 %v2511
        %v2548 = vpop.xlane.xlu0 %2547
        %2549 = vmax.xlane.f32.xlu0 %v2514
        %v2550 = vpop.xlane.xlu0 %2549
        %2551 = vmax.xlane.f32.xlu0 %v2516
        %v2552 = vpop.xlane.xlu0 %2551
        %2553 = vmax.xlane.f32.xlu0 %v2519
        %v2554 = vpop.xlane.xlu0 %2553
        %2555 = vmax.xlane.f32.xlu0 %v2521
        %v2556 = vpop.xlane.xlu0 %2555
        %2557 = vmax.xlane.f32.xlu0 %v2524
        %v2558 = vpop.xlane.xlu0 %2557
        %2559 = vmax.xlane.f32.xlu0 %v2526
        %v2560 = vpop.xlane.xlu0 %2559
        %2561 = vmax.xlane.f32.xlu0 %v2529
        %v2562 = vpop.xlane.xlu0 %2561
        %2563 = vmax.xlane.f32.xlu0 %v2531
        %v2564 = vpop.xlane.xlu0 %2563
        %v2565 = vsub.f32 %v2494, %v2534
        %v2566 = vsub.f32 %v2496, %v2536
        %v2567 = vsub.f32 %v2499, %v2538
        %v2568 = vsub.f32 %v2501, %v2540
        %v2569 = vsub.f32 %v2504, %v2542
        %v2570 = vsub.f32 %v2506, %v2544
        %v2571 = vsub.f32 %v2509, %v2546
        %v2572 = vsub.f32 %v2511, %v2548
        %v2573 = vsub.f32 %v2514, %v2550
        %v2574 = vsub.f32 %v2516, %v2552
        %v2575 = vsub.f32 %v2519, %v2554
        %v2576 = vsub.f32 %v2521, %v2556
        %v2577 = vsub.f32 %v2524, %v2558
        %v2578 = vsub.f32 %v2526, %v2560
        %v2579 = vsub.f32 %v2529, %v2562
        %v2580 = vsub.f32 %v2531, %v2564
        %v2581 = vmul.f32 %v2565, 1.442695
        %v2582 = vpow.pop %v2581
        %v2583 = vmul.f32 %v2566, 1.442695
        %v2584 = vpow.pop %v2583
        %v2585 = vmul.f32 %v2567, 1.442695
        %v2586 = vpow.pop %v2585
        %v2587 = vmul.f32 %v2568, 1.442695
        %v2588 = vpow.pop %v2587
        %v2589 = vmul.f32 %v2569, 1.442695
        %v2590 = vpow.pop %v2589
        %v2591 = vmul.f32 %v2570, 1.442695
        %v2592 = vpow.pop %v2591
        %v2593 = vmul.f32 %v2571, 1.442695
        %v2594 = vpow.pop %v2593
        %v2595 = vmul.f32 %v2572, 1.442695
        %v2596 = vpow.pop %v2595
        %v2597 = vmul.f32 %v2573, 1.442695
        %v2598 = vpow.pop %v2597
        %v2599 = vmul.f32 %v2574, 1.442695
        %v2600 = vpow.pop %v2599
        %v2601 = vmul.f32 %v2575, 1.442695
        %v2602 = vpow.pop %v2601
        %v2603 = vmul.f32 %v2576, 1.442695
        %v2604 = vpow.pop %v2603
        %v2605 = vmul.f32 %v2577, 1.442695
        %v2606 = vpow.pop %v2605
        %v2607 = vmul.f32 %v2578, 1.442695
        %v2608 = vpow.pop %v2607
        %v2609 = vmul.f32 %v2579, 1.442695
        %v2610 = vpow.pop %v2609
        %v2611 = vmul.f32 %v2580, 1.442695
        %v2612 = vpow.pop %v2611
        %2613 = vadd.xlane.f32.xlu0 %v2582
        %v2614 = vpop.xlane.xlu0 %2613
        %2615 = vadd.xlane.f32.xlu0 %v2584
        %v2616 = vpop.xlane.xlu0 %2615
        %2617 = vadd.xlane.f32.xlu0 %v2586
        %v2618 = vpop.xlane.xlu0 %2617
        %2619 = vadd.xlane.f32.xlu0 %v2588
        %v2620 = vpop.xlane.xlu0 %2619
        %2621 = vadd.xlane.f32.xlu0 %v2590
        %v2622 = vpop.xlane.xlu0 %2621
        %2623 = vadd.xlane.f32.xlu0 %v2592
        %v2624 = vpop.xlane.xlu0 %2623
        %2625 = vadd.xlane.f32.xlu0 %v2594
        %v2626 = vpop.xlane.xlu0 %2625
        %2627 = vadd.xlane.f32.xlu0 %v2596
        %v2628 = vpop.xlane.xlu0 %2627
        %2629 = vadd.xlane.f32.xlu0 %v2598
        %v2630 = vpop.xlane.xlu0 %2629
        %2631 = vadd.xlane.f32.xlu0 %v2600
        %v2632 = vpop.xlane.xlu0 %2631
        %2633 = vadd.xlane.f32.xlu0 %v2602
        %v2634 = vpop.xlane.xlu0 %2633
        %2635 = vadd.xlane.f32.xlu0 %v2604
        %v2636 = vpop.xlane.xlu0 %2635
        %2637 = vadd.xlane.f32.xlu0 %v2606
        %v2638 = vpop.xlane.xlu0 %2637
        %2639 = vadd.xlane.f32.xlu0 %v2608
        %v2640 = vpop.xlane.xlu0 %2639
        %2641 = vadd.xlane.f32.xlu0 %v2610
        %v2642 = vpop.xlane.xlu0 %2641
        %2643 = vadd.xlane.f32.xlu0 %v2612
        %v2644 = vpop.xlane.xlu0 %2643
        %v2645 = vrcp.pop %v2614
        %v2646 = vrcp.pop %v2616
        %v2647 = vrcp.pop %v2618
        %v2648 = vrcp.pop %v2620
        %v2649 = vrcp.pop %v2622
        %v2650 = vrcp.pop %v2624
        %v2651 = vrcp.pop %v2626
        %v2652 = vrcp.pop %v2628
        %v2653 = vrcp.pop %v2630
        %v2654 = vrcp.pop %v2632
        %v2655 = vrcp.pop %v2634
        %v2656 = vrcp.pop %v2636
        %v2657 = vrcp.pop %v2638
        %v2658 = vrcp.pop %v2640
        %v2659 = vrcp.pop %v2642
        %v2660 = vrcp.pop %v2644
        %v2661 = vmul.f32 %v2582, %v2645
        %v2662 = vmul.f32 %v2584, %v2646
        %v2663 = vmul.f32 %v2586, %v2647
        %v2664 = vmul.f32 %v2588, %v2648
        %v2665 = vmul.f32 %v2590, %v2649
        %v2666 = vmul.f32 %v2592, %v2650
        %v2667 = vmul.f32 %v2594, %v2651
        %v2668 = vmul.f32 %v2596, %v2652
        %v2669 = vmul.f32 %v2598, %v2653
        %v2670 = vmul.f32 %v2600, %v2654
        %v2671 = vmul.f32 %v2602, %v2655
        %v2672 = vmul.f32 %v2604, %v2656
        %v2673 = vmul.f32 %v2606, %v2657
        %v2674 = vmul.f32 %v2608, %v2658
        %v2675 = vmul.f32 %v2610, %v2659
        %v2676 = vmul.f32 %v2612, %v2660
        %s2677 = scalar_lea.vmem %s474, 384 [#allocation13]
        %2678 = vst [vmem:[%s2677] sm:$0xff] %v2661
        %2679 = vst [vmem:[%s2677 + $0x8] sm:$0xff] %v2662
        %2680 = vst [vmem:[%s2677 + $0x10] sm:$0xff] %v2663
        %2681 = vst [vmem:[%s2677 + $0x18] sm:$0xff] %v2664
        %2682 = vst [vmem:[%s2677 + $0x20] sm:$0xff] %v2665
        %2683 = vst [vmem:[%s2677 + $0x28] sm:$0xff] %v2666
        %2684 = vst [vmem:[%s2677 + $0x30] sm:$0xff] %v2667
        %2685 = vst [vmem:[%s2677 + $0x38] sm:$0xff] %v2668
        %2686 = vst [vmem:[%s2677 + $0x40] sm:$0xff] %v2669
        %2687 = vst [vmem:[%s2677 + $0x48] sm:$0xff] %v2670
        %2688 = vst [vmem:[%s2677 + $0x50] sm:$0xff] %v2671
        %2689 = vst [vmem:[%s2677 + $0x58] sm:$0xff] %v2672
        %2690 = vst [vmem:[%s2677 + $0x60] sm:$0xff] %v2673
        %2691 = vst [vmem:[%s2677 + $0x68] sm:$0xff] %v2674
        %2692 = vst [vmem:[%s2677 + $0x70] sm:$0xff] %v2675
        %2693 = vst [vmem:[%s2677 + $0x78] sm:$0xff] %v2676
        %v2694 = vpack.c.bf16 %v2662, %v2661
        %v2695 = vpack.c.bf16 %v2664, %v2663
        %v2696 = vpack.c.bf16 %v2666, %v2665
        %v2697 = vpack.c.bf16 %v2668, %v2667
        %v2698 = vpack.c.bf16 %v2670, %v2669
        %v2699 = vpack.c.bf16 %v2672, %v2671
        %v2700 = vpack.c.bf16 %v2674, %v2673
        %v2701 = vpack.c.bf16 %v2676, %v2675
        %2702 = vrot.lane.b32.xlu0 %v1290, 32
        %v2703 = vpop.permute.xlu0 %2702
        %2704 = vrot.lane.b32.xlu0 %v1291, 32
        %v2705 = vpop.permute.xlu0 %2704
        %2706 = vrot.lane.b32.xlu0 %v1292, 32
        %v2707 = vpop.permute.xlu0 %2706
        %2708 = vrot.lane.b32.xlu0 %v1293, 32
        %v2709 = vpop.permute.xlu0 %2708
        %2710 = vrot.lane.b32.xlu0 %v1294, 32
        %v2711 = vpop.permute.xlu0 %2710
        %2712 = vrot.lane.b32.xlu0 %v1295, 32
        %v2713 = vpop.permute.xlu0 %2712
        %2714 = vrot.lane.b32.xlu0 %v1296, 32
        %v2715 = vpop.permute.xlu0 %2714
        %2716 = vrot.lane.b32.xlu0 %v1297, 32
        %v2717 = vpop.permute.xlu0 %2716
        %2726 = vmatpush.bf16.msra.mxu0 %v2717
        %2727 = vmatpush.bf16.msra.mxu0 %v2715
        %2728 = vmatpush.bf16.msra.mxu0 %v2713
        %2729 = vmatpush.bf16.msra.mxu0 %v2711
        %2730 = vmatpush.bf16.msra.mxu0 %v2709
        %2731 = vmatpush.bf16.msra.mxu0 %v2707
        %2732 = vmatpush.bf16.msra.mxu0 %v2705
        %2733 = vmatpush.bf16.msra.mxu0 %v2703
        %2734 = vmatmul.bf16.gmra.mxu0 %v2694
        %v2735 = vpop.f32.mrf.mxu0
        %v2736 = vadd.f32 0.0, %v2735
        %v2737 = vpop.f32.mrf.mxu0
        %v2738 = vadd.f32 0.0, %v2737
        %2739 = vmatmul.bf16.gmra.mxu0 %v2695
        %v2740 = vpop.f32.mrf.mxu0
        %v2741 = vadd.f32 0.0, %v2740
        %v2742 = vpop.f32.mrf.mxu0
        %v2743 = vadd.f32 0.0, %v2742
        %2744 = vmatmul.bf16.gmra.mxu0 %v2696
        %v2745 = vpop.f32.mrf.mxu0
        %v2746 = vadd.f32 0.0, %v2745
        %v2747 = vpop.f32.mrf.mxu0
        %v2748 = vadd.f32 0.0, %v2747
        %2749 = vmatmul.bf16.gmra.mxu0 %v2697
        %v2750 = vpop.f32.mrf.mxu0
        %v2751 = vadd.f32 0.0, %v2750
        %v2752 = vpop.f32.mrf.mxu0
        %v2753 = vadd.f32 0.0, %v2752
        %2754 = vmatmul.bf16.gmra.mxu0 %v2698
        %v2755 = vpop.f32.mrf.mxu0
        %v2756 = vadd.f32 0.0, %v2755
        %v2757 = vpop.f32.mrf.mxu0
        %v2758 = vadd.f32 0.0, %v2757
        %2759 = vmatmul.bf16.gmra.mxu0 %v2699
        %v2760 = vpop.f32.mrf.mxu0
        %v2761 = vadd.f32 0.0, %v2760
        %v2762 = vpop.f32.mrf.mxu0
        %v2763 = vadd.f32 0.0, %v2762
        %2764 = vmatmul.bf16.gmra.mxu0 %v2700
        %v2765 = vpop.f32.mrf.mxu0
        %v2766 = vadd.f32 0.0, %v2765
        %v2767 = vpop.f32.mrf.mxu0
        %v2768 = vadd.f32 0.0, %v2767
        %2769 = vmatmul.bf16.gmra.mxu0 %v2701
        %v2770 = vpop.f32.mrf.mxu0
        %v2771 = vadd.f32 0.0, %v2770
        %v2772 = vpop.f32.mrf.mxu0
        %v2773 = vadd.f32 0.0, %v2772
        %2774 = vdwg.mxu0
        %v2775 = vpack.c.bf16 %v2738, %v2736
        %v2776 = vpack.c.bf16 %v2743, %v2741
        %v2777 = vpack.c.bf16 %v2748, %v2746
        %v2778 = vpack.c.bf16 %v2753, %v2751
        %v2779 = vpack.c.bf16 %v2758, %v2756
        %v2780 = vpack.c.bf16 %v2763, %v2761
        %v2781 = vpack.c.bf16 %v2768, %v2766
        %v2782 = vpack.c.bf16 %v2773, %v2771
        %v2783 = vld [vmem:[#allocation11 + $0x30] sm:$0xf]
        %v2784 = vld [vmem:[#allocation11 + $0x34] sm:$0xf]
        %v2785 = vld [vmem:[#allocation11 + $0x38] sm:$0xf]
        %v2786 = vld [vmem:[#allocation11 + $0x3c] sm:$0xf]
        %v2791 = vunpack.c.l.b16 %v2783
        %v2792 = vunpack.c.l.b16 %v2784
        %v2793 = vunpack.c.l.b16 %v2785
        %v2794 = vunpack.c.l.b16 %v2786
        %v2795 = vpack.c.b16 %v2792, %v2791
        %v2796 = vpack.c.b16 %v2794, %v2793
        %v2800 = vsel %vm1008, %v2775, 0
        %v2803 = vsel %vm1008, %v2776, 0
        %v2806 = vsel %vm1008, %v2777, 0
        %v2809 = vsel %vm1008, %v2778, 0
        %v2812 = vsel %vm1008, %v2779, 0
        %v2815 = vsel %vm1008, %v2780, 0
        %v2818 = vsel %vm1008, %v2781, 0
        %v2821 = vsel %vm1008, %v2782, 0
        %2823 = vmatpush.bf16.msra.mxu0 0
        %2824 = vmatpush.bf16.msra.mxu0 0
        %2825 = vmatpush.bf16.msra.mxu0 0
        %2826 = vmatpush.bf16.msra.mxu0 0
        %2827 = vmatpush.bf16.msra.mxu0 0
        %2828 = vmatpush.bf16.msra.mxu0 0
        %2829 = vmatpush.bf16.msra.mxu0 %v2796
        %2830 = vmatpush.bf16.msra.mxu0 %v2795
        %2831 = vmatmul.bf16.gmra.mxu0 %v2800
        %v2832 = vpop.f32.mrf.mxu0
        %v2833 = vadd.f32 0.0, %v2832
        %v2834 = vpop.f32.mrf.mxu0
        %v2835 = vadd.f32 0.0, %v2834
        %2836 = vmatmul.bf16.gmra.mxu0 %v2803
        %v2837 = vpop.f32.mrf.mxu0
        %v2838 = vadd.f32 0.0, %v2837
        %v2839 = vpop.f32.mrf.mxu0
        %v2840 = vadd.f32 0.0, %v2839
        %2841 = vmatmul.bf16.gmra.mxu0 %v2806
        %v2842 = vpop.f32.mrf.mxu0
        %v2843 = vadd.f32 0.0, %v2842
        %v2844 = vpop.f32.mrf.mxu0
        %v2845 = vadd.f32 0.0, %v2844
        %2846 = vmatmul.bf16.gmra.mxu0 %v2809
        %v2847 = vpop.f32.mrf.mxu0
        %v2848 = vadd.f32 0.0, %v2847
        %v2849 = vpop.f32.mrf.mxu0
        %v2850 = vadd.f32 0.0, %v2849
        %2851 = vmatmul.bf16.gmra.mxu0 %v2812
        %v2852 = vpop.f32.mrf.mxu0
        %v2853 = vadd.f32 0.0, %v2852
        %v2854 = vpop.f32.mrf.mxu0
        %v2855 = vadd.f32 0.0, %v2854
        %2856 = vmatmul.bf16.gmra.mxu0 %v2815
        %v2857 = vpop.f32.mrf.mxu0
        %v2858 = vadd.f32 0.0, %v2857
        %v2859 = vpop.f32.mrf.mxu0
        %v2860 = vadd.f32 0.0, %v2859
        %2861 = vmatmul.bf16.gmra.mxu0 %v2818
        %v2862 = vpop.f32.mrf.mxu0
        %v2863 = vadd.f32 0.0, %v2862
        %v2864 = vpop.f32.mrf.mxu0
        %v2865 = vadd.f32 0.0, %v2864
        %2866 = vmatmul.bf16.gmra.mxu0 %v2821
        %v2867 = vpop.f32.mrf.mxu0
        %v2868 = vadd.f32 0.0, %v2867
        %v2869 = vpop.f32.mrf.mxu0
        %v2870 = vadd.f32 0.0, %v2869
        %2871 = vdwg.mxu0
        %v2872 = vadd.f32 %v2388, %v2833
        %v2873 = vadd.f32 %v2389, %v2835
        %v2874 = vadd.f32 %v2390, %v2838
        %v2875 = vadd.f32 %v2391, %v2840
        %v2876 = vadd.f32 %v2392, %v2843
        %v2877 = vadd.f32 %v2393, %v2845
        %v2878 = vadd.f32 %v2394, %v2848
        %v2879 = vadd.f32 %v2395, %v2850
        %v2880 = vadd.f32 %v2396, %v2853
        %v2881 = vadd.f32 %v2397, %v2855
        %v2882 = vadd.f32 %v2398, %v2858
        %v2883 = vadd.f32 %v2399, %v2860
        %v2884 = vadd.f32 %v2400, %v2863
        %v2885 = vadd.f32 %v2401, %v2865
        %v2886 = vadd.f32 %v2402, %v2868
        %v2887 = vadd.f32 %v2403, %v2870
        %v2888 = vld [vmem:[%s7] sm:$0x1]
        %v2890 = vperm.slane %v2888, 0
        %v2892 = vadd.f32 %v2872, %v2890
        %v2893 = vadd.f32 %v2873, %v2890
        %v2894 = vadd.f32 %v2874, %v2890
        %v2895 = vadd.f32 %v2875, %v2890
        %v2896 = vadd.f32 %v2876, %v2890
        %v2897 = vadd.f32 %v2877, %v2890
        %v2898 = vadd.f32 %v2878, %v2890
        %v2899 = vadd.f32 %v2879, %v2890
        %v2900 = vadd.f32 %v2880, %v2890
        %v2901 = vadd.f32 %v2881, %v2890
        %v2902 = vadd.f32 %v2882, %v2890
        %v2903 = vadd.f32 %v2883, %v2890
        %v2904 = vadd.f32 %v2884, %v2890
        %v2905 = vadd.f32 %v2885, %v2890
        %v2906 = vadd.f32 %v2886, %v2890
        %v2907 = vadd.f32 %v2887, %v2890
        %2908 = vst [vmem:[%s467] sm:$0xff] %v2892
        %2909 = vst [vmem:[%s467 + $0x8] sm:$0xff] %v2893
        %2910 = vst [vmem:[%s467 + $0x10] sm:$0xff] %v2894
        %2911 = vst [vmem:[%s467 + $0x18] sm:$0xff] %v2895
        %2912 = vst [vmem:[%s467 + $0x20] sm:$0xff] %v2896
        %2913 = vst [vmem:[%s467 + $0x28] sm:$0xff] %v2897
        %2914 = vst [vmem:[%s467 + $0x30] sm:$0xff] %v2898
        %2915 = vst [vmem:[%s467 + $0x38] sm:$0xff] %v2899
        %2916 = vst [vmem:[%s467 + $0x40] sm:$0xff] %v2900
        %2917 = vst [vmem:[%s467 + $0x48] sm:$0xff] %v2901
        %2918 = vst [vmem:[%s467 + $0x50] sm:$0xff] %v2902
        %2919 = vst [vmem:[%s467 + $0x58] sm:$0xff] %v2903
        %2920 = vst [vmem:[%s467 + $0x60] sm:$0xff] %v2904
        %2921 = vst [vmem:[%s467 + $0x68] sm:$0xff] %v2905
        %2922 = vst [vmem:[%s467 + $0x70] sm:$0xff] %v2906
        %2923 = vst [vmem:[%s467 + $0x78] sm:$0xff] %v2907
        %s2924 = sand.u32 %s236, 1
        %s2925 = scalar_lea.sflag [#allocation5], %s2924
        %s2926 = sand.u32 %s236, 1
        %s2927 = smul.addr %s2926, 128
        %s2928 = scalar_lea.vmem [#allocation12], %s2927
        %s2929 = sand.u32 %s264, 1
        %s2930 = scalar_lea.sflag [#allocation14], %s2929
        %s2931 = sand.u32 %s264, 1
        %s2932 = smul.addr %s2931, 512
        %s2933 = scalar_lea.vmem [#allocation13], %s2932
        // Predicated region
        $region77: #{tpu_custom_call.1} parent=51 // pred_check
          %p2934 = pneg %p246
        $region78: #{tpu_custom_call.1} parent=51 // pred_check_branch
          %2936 = sbr.rel (%p2934) target = $region80
        $region79: #{tpu_custom_call.1} parent=51 // pred_region
          %s2937 = smul.u32 16, %s39
          %2939 = vsyncadd %s2925, 0
          %s2940 = smul.addr %s38, 16
          %s2941 = sadd.s32 %s2937, %s2940
          %s2942 = smul.addr %s2941, 8
          %s2943 = scalar_lea.hbm %s8, %s2942
          %s2944 = sshll.u32 %s2928, 4
          %s2945 = int_to_ptr.vmem [resolvable:$true] %s2944
          %s2946 = sshll.u32 %s2943, 4
          %s2947 = int_to_ptr.hbm [resolvable:$true] %s2946
          %2952 = dma.vmem_to_hbm [thread:$0]  %s2945, 2048, %s2947, %s2925, 128, 128, 8
        $region80: #{tpu_custom_call.1} parent=51 // pred_fallthru
          _
        // Predicated region
        $region81: #{tpu_custom_call.1} parent=51 // pred_check
          %p2953 = pneg %p274
        $region82: #{tpu_custom_call.1} parent=51 // pred_check_branch
          %2955 = sbr.rel (%p2953) target = $region84
        $region83: #{tpu_custom_call.1} parent=51 // pred_region
          %s2956 = smul.u32 16, %s39
          %2958 = vsyncadd %s2930, 0
          %s2959 = smul.addr %s38, 64
          %s2960 = sadd.s32 %s2956, %s2959
          %s2961 = smul.addr %s2960, 8
          %s2962 = scalar_lea.hbm %s9, %s2961
          %s2963 = sshll.u32 %s2933, 4
          %s2964 = int_to_ptr.vmem [resolvable:$true] %s2963
          %s2965 = sshll.u32 %s2962, 4
          %s2966 = int_to_ptr.hbm [resolvable:$true] %s2965
          %2971 = dma.vmem_to_hbm [thread:$0]  %s2964, 8192, %s2966, %s2930, 128, 128, 8
        $region84: #{tpu_custom_call.1} parent=51 // pred_fallthru
          _
      $region52: #{tpu_custom_call.1} parent=5 // pred_fallthru
        _
      %p2972 = scmp.le.s32.totalorder 2, %s29
      // Predicated region
      $region85: #{tpu_custom_call.1} parent=5 // pred_check
        %p2973 = pneg %p2972
      $region86: #{tpu_custom_call.1} parent=5 // pred_check_branch
        %2975 = sbr.rel (%p2973) target = $region88
      $region87: #{tpu_custom_call.1} parent=5 // pred_region
        %s2976 = ssub.s32 %s29, 2
        // Predicated region
        $region89: #{tpu_custom_call.1} parent=87 // pred_check
          %p2977 = pneg %p252
        $region90: #{tpu_custom_call.1} parent=87 // pred_check_branch
          %2979 = sbr.rel (%p2977) target = $region92
        $region91: #{tpu_custom_call.1} parent=87 // pred_region
          %s2980 = sand.u32 %s237, 1
          %s2981 = scalar_lea.sflag [#allocation5], %s2980
          %s2982 = sand.u32 %s237, 1
          %s2983 = smul.addr %s2982, 128
          %s2984 = scalar_lea.vmem [#allocation12], %s2983
          %2986 = dma.done %s2981, 2048
        $region92: #{tpu_custom_call.1} parent=87 // pred_fallthru
          _
        // Predicated region
        $region93: #{tpu_custom_call.1} parent=87 // pred_check
          %p2987 = pneg %p280
        $region94: #{tpu_custom_call.1} parent=87 // pred_check_branch
          %2989 = sbr.rel (%p2987) target = $region96
        $region95: #{tpu_custom_call.1} parent=87 // pred_region
          %s2990 = sand.u32 %s265, 1
          %s2991 = scalar_lea.sflag [#allocation14], %s2990
          %s2992 = sand.u32 %s265, 1
          %s2993 = smul.addr %s2992, 512
          %s2994 = scalar_lea.vmem [#allocation13], %s2993
          %2996 = dma.done %s2991, 8192
        $region96: #{tpu_custom_call.1} parent=87 // pred_fallthru
          _
      $region88: #{tpu_custom_call.1} parent=5 // pred_fallthru
        _
    $region6: #{tpu_custom_call.1} parent=1 // loop_footer
      %s33 = sadd.s32 1, %s29
    $region7: #{tpu_custom_call.1} parent=1 // loop_footer_branch
      %28 = sbr.rel target = $region3
    $region8: #{tpu_custom_call.1} parent=1 // loop_exit
      _
    %2997 = vsyncpa [#allocation4], 1
    %s2998 = scalar_lea.sflag [#allocation4], 1
    %2999 = vsyncpa %s2998, 1
    %3000 = vsyncpa [#allocation7], 1
    %s3001 = scalar_lea.sflag [#allocation7], 1
    %3002 = vsyncpa %s3001, 1
    %3003 = vsyncpa [#allocation10], 1
    %3004 = vsyncpa [#allocation5], 1
    %s3005 = scalar_lea.sflag [#allocation5], 1
    %3006 = vsyncpa %s3005, 1
    %3007 = vsyncpa [#allocation14], 1
    %s3008 = scalar_lea.sflag [#allocation14], 1
    %3009 = vsyncpa %s3008, 1

</llo_original>
